<compile_context>
chip_gen: v6e
topology: v6e:2x2x1
jax: 0.10.0
libtpu: 0.0.40
codegen_flags: <defaults>
</compile_context>

<pallas_src>
import functools
import math

import jax
import jax.numpy as jnp
from jax.experimental import pallas as pl
from jax.experimental.pallas import tpu as pltpu


CONV_OUTPUT_SIZE = 2048
LANE = 128


def _round_up(x, m):
    return ((x + m - 1) // m) * m


def _error_model_kernel(feat_ref, w1_ref, b1_ref, w2_ref, b2_ref,
                        w3_ref, b3_ref, act_ref, out_ref):
    # fc1 + ReLU:  (TB, 2048)bf16 @ (2048, H)bf16 -> f32 accum
    h1 = jnp.dot(feat_ref[...], w1_ref[...],
                 preferred_element_type=jnp.float32) + b1_ref[...]
    h1 = jnp.maximum(h1, 0.0).astype(jnp.bfloat16)
    # fc2 + ReLU
    h2 = jnp.dot(h1, w2_ref[...],
                 preferred_element_type=jnp.float32) + b2_ref[...]
    h2 = jnp.maximum(h2, 0.0).astype(jnp.bfloat16)
    # fc3 + ReLU
    h3 = jnp.dot(h2, w3_ref[...],
                 preferred_element_type=jnp.float32) + b3_ref[...]
    h3 = jnp.maximum(h3, 0.0)
    # gather(1, action): exact 0/1 select via iota == action, then row sum.
    col = jax.lax.broadcasted_iota(jnp.int32, h3.shape, 1)
    mask = col == act_ref[...]                       # (TB, A) vs (TB, 1)
    out_ref[...] = jnp.sum(jnp.where(mask, h3, 0.0), axis=1, keepdims=True)


@jax.jit
def error_model_forward(feat, params, action):
    """feat: (B, 2048) f32, action: (B, 1) int32 -> error: (B, 1) f32."""
    B = feat.shape[0]
    w1, b1, w2, b2, w3, b3 = params
    H = w1.shape[1]
    A = w3.shape[1]
    K = CONV_OUTPUT_SIZE

    # Lane-aligned padding of hidden / action dims; batch tile is a multiple
    # of 16 (bf16 sublane packing), capped at 256 rows per grid step.
    H_pad = _round_up(H, LANE)
    A_pad = _round_up(A, LANE)
    TB = min(256, _round_up(B, 16))
    B_pad = _round_up(B, TB)
    n_tiles = B_pad // TB

    # Pad + cast matmul operands to bf16 (f32 accumulation in-kernel).
    # Zero padding keeps the math exact; biases stay f32.
    featp = jnp.pad(feat, ((0, B_pad - B), (0, 0))).astype(jnp.bfloat16)
    w1p = jnp.pad(w1, ((0, 0), (0, H_pad - H))).astype(jnp.bfloat16)
    w2p = jnp.pad(w2, ((0, H_pad - H), (0, H_pad - H))).astype(jnp.bfloat16)
    w3p = jnp.pad(w3, ((0, H_pad - H), (0, A_pad - A))).astype(jnp.bfloat16)
    b1p = jnp.pad(b1, (0, H_pad - H)).reshape(1, H_pad)
    b2p = jnp.pad(b2, (0, H_pad - H)).reshape(1, H_pad)
    b3p = jnp.pad(b3, (0, A_pad - A)).reshape(1, A_pad)
    actp = jnp.pad(action.astype(jnp.int32), ((0, B_pad - B), (0, 0)))

    cost = pl.CostEstimate(
        flops=2 * B_pad * (K * H_pad + H_pad * H_pad + H_pad * A_pad),
        transcendentals=0,
        bytes_accessed=(featp.size * 2
                        + (w1p.size + w2p.size + w3p.size) * 2
                        + (b1p.size + b2p.size + b3p.size) * 4
                        + actp.size * 4 + B_pad * 4),
    )

    # VMEM budget: resident weights/biases + 2x double-buffered per-step
    # tiles (feat / action / out) + f32 intermediates.  Only raise the scoped
    # limit when needed, and keep it bounded (v7x has 64 MiB per TC).
    resident = ((w1p.size + w2p.size + w3p.size) * 2
                + (b1p.size + b2p.size + b3p.size) * 4)
    per_step = 2 * (TB * K * 2 + TB * 4 + TB * 4) + TB * (2 * H_pad + A_pad) * 4
    vmem_needed = resident + per_step
    vmem_limit = min(2 * vmem_needed, 56 << 20) if vmem_needed > (24 << 20) else None

    grid_spec = pltpu.PrefetchScalarGridSpec(
        num_scalar_prefetch=0,
        grid=(n_tiles,),
        in_specs=[
            pl.BlockSpec((TB, K), lambda i: (i, 0)),           # feat tile
            pl.BlockSpec((K, H_pad), lambda i: (0, 0)),        # w1 (resident)
            pl.BlockSpec((1, H_pad), lambda i: (0, 0)),        # b1
            pl.BlockSpec((H_pad, H_pad), lambda i: (0, 0)),    # w2
            pl.BlockSpec((1, H_pad), lambda i: (0, 0)),        # b2
            pl.BlockSpec((H_pad, A_pad), lambda i: (0, 0)),    # w3
            pl.BlockSpec((1, A_pad), lambda i: (0, 0)),        # b3
            pl.BlockSpec((TB, 1), lambda i: (i, 0)),           # action tile
        ],
        out_specs=pl.BlockSpec((TB, 1), lambda i: (i, 0)),
    )

    out = pl.pallas_call(
        _error_model_kernel,
        out_shape=jax.ShapeDtypeStruct((B_pad, 1), jnp.float32),
        grid_spec=grid_spec,
        compiler_params=pltpu.CompilerParams(
            dimension_semantics=("parallel",),
            vmem_limit_bytes=vmem_limit,
        ),
        cost_estimate=cost,
    )(featp, w1p, b1p, w2p, b2p, w3p, b3p, actp)
    return out[:B]


def xavier_uniform(key, fan_in, fan_out, gain=1.0):
    # PyTorch nn.init.xavier_uniform_ on a (out, in) weight; we store (in, out).
    bound = gain * math.sqrt(6.0 / (fan_in + fan_out))
    return jax.random.uniform(key, (fan_in, fan_out), jnp.float32,
                              minval=-bound, maxval=bound)


def init_params(key, hidden_size, num_actions):
    k1, k2, k3 = jax.random.split(key, 3)
    w1 = xavier_uniform(k1, CONV_OUTPUT_SIZE, hidden_size)
    b1 = jnp.zeros((hidden_size,), jnp.float32)
    w2 = xavier_uniform(k2, hidden_size, hidden_size)
    b2 = jnp.zeros((hidden_size,), jnp.float32)
    w3 = xavier_uniform(k3, hidden_size, num_actions)
    b3 = jnp.zeros((num_actions,), jnp.float32)
    return (w1, b1, w2, b2, w3, b3)


def features_standin(key, x_nchw):
    # TODO(synk): stand-in for ImpalaCNN (definition not provided); a fixed
    # deterministic linear projection of the flattened NCHW image to 2048 dims.
    B = x_nchw.shape[0]
    flat = x_nchw.reshape(B, -1)
    proj = jax.random.normal(key, (flat.shape[1], CONV_OUTPUT_SIZE),
                             jnp.float32) * 0.02
    return flat @ proj


if __name__ == "__main__":
    B, C, HW = 2, 4, 16
    hidden_size, num_actions = 32, 6

    key = jax.random.PRNGKey(0)
    k_img, k_feat, k_params, k_act = jax.random.split(key, 4)

    x = jax.random.normal(k_img, (B, C, HW, HW), jnp.float32)   # NCHW obs
    action = jax.random.randint(k_act, (B, 1), 0, num_actions, jnp.int32)

    feat = features_standin(k_feat, x)                          # (B, 2048)
    params = init_params(k_params, hidden_size, num_actions)

    error = error_model_forward(feat, params, action)
    error = jax.block_until_ready(error)
    assert error.shape == (B, 1)

    w1, b1, w2, b2, w3, b3 = params

    # Reference mirroring the kernel's numerics (bf16 operands, f32 accum).
    fb = feat.astype(jnp.bfloat16)
    w1b, w2b, w3b = (w.astype(jnp.bfloat16) for w in (w1, w2, w3))
    h = jnp.maximum(jnp.dot(fb, w1b, preferred_element_type=jnp.float32) + b1, 0.0)
    h = jnp.maximum(jnp.dot(h.astype(jnp.bfloat16), w2b,
                            preferred_element_type=jnp.float32) + b2, 0.0)
    h = jnp.maximum(jnp.dot(h.astype(jnp.bfloat16), w3b,
                            preferred_element_type=jnp.float32) + b3, 0.0)
    ref_bf16 = jnp.take_along_axis(h, action, axis=1)
    assert jnp.allclose(error, ref_bf16, atol=2e-4, rtol=2e-4)

    # Loose check against the pure-f32 reference semantics of the module.
    hf = jnp.maximum(feat @ w1 + b1, 0.0)
    hf = jnp.maximum(hf @ w2 + b2, 0.0)
    hf = jnp.maximum(hf @ w3 + b3, 0.0)
    ref_f32 = jnp.take_along_axis(hf, action, axis=1)
    assert jnp.allclose(error, ref_f32, atol=5e-2, rtol=5e-2)

    print("KERNEL_OK")
</pallas_src>

<mosaic_0001>
module attributes {stable_mosaic.version = 11 : i64} {
  func.func @_error_model_kernel(%arg0: i32, %arg1: memref<16x2048xbf16, #tpu.memory_space<vmem>>, %arg2: memref<2048x128xbf16, #tpu.memory_space<vmem>>, %arg3: memref<1x128xf32, #tpu.memory_space<vmem>>, %arg4: memref<128x128xbf16, #tpu.memory_space<vmem>>, %arg5: memref<1x128xf32, #tpu.memory_space<vmem>>, %arg6: memref<128x128xbf16, #tpu.memory_space<vmem>>, %arg7: memref<1x128xf32, #tpu.memory_space<vmem>>, %arg8: memref<16x1xi32, #tpu.memory_space<vmem>>, %arg9: memref<16x1xf32, #tpu.memory_space<vmem>>) attributes {dimension_semantics = [#tpu.dimension_semantics<parallel>], iteration_bounds = array<i64: 1>, scalar_prefetch = 0 : i64, scratch_operands = 0 : i64, tpu.core_type = #tpu.core_type<tc>, window_params = [{transform_indices = @transform_0, window_bounds = array<i64: 16, 2048>}, {pipeline_mode = #tpu.pipeline_mode<synchronous>, transform_indices = @transform_1, window_bounds = array<i64: 2048, 128>}, {pipeline_mode = #tpu.pipeline_mode<synchronous>, transform_indices = @transform_2, window_bounds = array<i64: 1, 128>}, {pipeline_mode = #tpu.pipeline_mode<synchronous>, transform_indices = @transform_3, window_bounds = array<i64: 128, 128>}, {pipeline_mode = #tpu.pipeline_mode<synchronous>, transform_indices = @transform_4, window_bounds = array<i64: 1, 128>}, {pipeline_mode = #tpu.pipeline_mode<synchronous>, transform_indices = @transform_5, window_bounds = array<i64: 128, 128>}, {pipeline_mode = #tpu.pipeline_mode<synchronous>, transform_indices = @transform_6, window_bounds = array<i64: 1, 128>}, {transform_indices = @transform_7, window_bounds = array<i64: 16, 1>}, {transform_indices = @transform_8, window_bounds = array<i64: 16, 1>}]} {
    %c0 = arith.constant 0 : index
    %c0_0 = arith.constant 0 : index
    %0 = vector.load %arg1[%c0, %c0_0] : memref<16x2048xbf16, #tpu.memory_space<vmem>>, vector<16x2048xbf16>
    %c0_1 = arith.constant 0 : index
    %c0_2 = arith.constant 0 : index
    %1 = vector.load %arg2[%c0_1, %c0_2] : memref<2048x128xbf16, #tpu.memory_space<vmem>>, vector<2048x128xbf16>
    %cst = arith.constant dense<0.000000e+00> : vector<16x128xf32>
    %2 = tpu.matmul %0, %1, %cst {dimension_numbers = #tpu.dot_dimension_numbers<[1], [0], [0], [1], [0, 0, 1, 1], [], []>} : vector<16x2048xbf16>, vector<2048x128xbf16>, vector<16x128xf32> -> vector<16x128xf32>
    %c0_3 = arith.constant 0 : index
    %c0_4 = arith.constant 0 : index
    %3 = vector.load %arg3[%c0_3, %c0_4] : memref<1x128xf32, #tpu.memory_space<vmem>>, vector<1x128xf32>
    %4 = vector.broadcast %3 : vector<1x128xf32> to vector<16x128xf32>
    %5 = arith.addf %2, %4 : vector<16x128xf32>
    %cst_5 = arith.constant 0.000000e+00 : f32
    %6 = vector.broadcast %cst_5 : f32 to vector<16x128xf32>
    %7 = arith.maximumf %5, %6 : vector<16x128xf32>
    %8 = arith.truncf %7 : vector<16x128xf32> to vector<16x128xbf16>
    %c0_6 = arith.constant 0 : index
    %c0_7 = arith.constant 0 : index
    %9 = vector.load %arg4[%c0_6, %c0_7] : memref<128x128xbf16, #tpu.memory_space<vmem>>, vector<128x128xbf16>
    %cst_8 = arith.constant dense<0.000000e+00> : vector<16x128xf32>
    %10 = tpu.matmul %8, %9, %cst_8 {dimension_numbers = #tpu.dot_dimension_numbers<[1], [0], [0], [1], [0, 0, 1, 1], [], []>} : vector<16x128xbf16>, vector<128x128xbf16>, vector<16x128xf32> -> vector<16x128xf32>
    %c0_9 = arith.constant 0 : index
    %c0_10 = arith.constant 0 : index
    %11 = vector.load %arg5[%c0_9, %c0_10] : memref<1x128xf32, #tpu.memory_space<vmem>>, vector<1x128xf32>
    %12 = vector.broadcast %11 : vector<1x128xf32> to vector<16x128xf32>
    %13 = arith.addf %10, %12 : vector<16x128xf32>
    %cst_11 = arith.constant 0.000000e+00 : f32
    %14 = vector.broadcast %cst_11 : f32 to vector<16x128xf32>
    %15 = arith.maximumf %13, %14 : vector<16x128xf32>
    %16 = arith.truncf %15 : vector<16x128xf32> to vector<16x128xbf16>
    %c0_12 = arith.constant 0 : index
    %c0_13 = arith.constant 0 : index
    %17 = vector.load %arg6[%c0_12, %c0_13] : memref<128x128xbf16, #tpu.memory_space<vmem>>, vector<128x128xbf16>
    %cst_14 = arith.constant dense<0.000000e+00> : vector<16x128xf32>
    %18 = tpu.matmul %16, %17, %cst_14 {dimension_numbers = #tpu.dot_dimension_numbers<[1], [0], [0], [1], [0, 0, 1, 1], [], []>} : vector<16x128xbf16>, vector<128x128xbf16>, vector<16x128xf32> -> vector<16x128xf32>
    %c0_15 = arith.constant 0 : index
    %c0_16 = arith.constant 0 : index
    %19 = vector.load %arg7[%c0_15, %c0_16] : memref<1x128xf32, #tpu.memory_space<vmem>>, vector<1x128xf32>
    %20 = vector.broadcast %19 : vector<1x128xf32> to vector<16x128xf32>
    %21 = arith.addf %18, %20 : vector<16x128xf32>
    %cst_17 = arith.constant 0.000000e+00 : f32
    %22 = vector.broadcast %cst_17 : f32 to vector<16x128xf32>
    %23 = arith.maximumf %21, %22 : vector<16x128xf32>
    %24 = tpu.iota {dimensions = array<i32: 1>} : vector<16x128xi32>
    %c0_18 = arith.constant 0 : index
    %c0_19 = arith.constant 0 : index
    %25 = vector.load %arg8[%c0_18, %c0_19] : memref<16x1xi32, #tpu.memory_space<vmem>>, vector<16x1xi32>
    %26 = vector.broadcast %25 : vector<16x1xi32> to vector<16x128xi32>
    %27 = arith.cmpi eq, %24, %26 : vector<16x128xi32>
    %cst_20 = arith.constant 0.000000e+00 : f32
    %28 = vector.broadcast %cst_20 : f32 to vector<16x128xf32>
    %29 = arith.select %27, %23, %28 : vector<16x128xi1>, vector<16x128xf32>
    %cst_21 = arith.constant dense<0.000000e+00> : vector<16xf32>
    %30 = vector.multi_reduction <add>, %29, %cst_21 [1] : vector<16x128xf32> to vector<16xf32>
    %31 = vector.shape_cast %30 : vector<16xf32> to vector<16x1xf32>
    %c0_22 = arith.constant 0 : index
    %c0_23 = arith.constant 0 : index
    %32 = vector.load %arg9[%c0_22, %c0_23] : memref<16x1xf32, #tpu.memory_space<vmem>>, vector<16x1xf32>
    tpu.vector_store %arg9[%c0_22, %c0_23], %31 {strides = array<i32>} : memref<16x1xf32, #tpu.memory_space<vmem>>, vector<16x1xf32>,
    return
  }
  func.func @transform_0(%arg0: i32) -> (i32, i32) {
    %c0_i32 = arith.constant 0 : i32
    %c0_i32_0 = arith.constant 0 : i32
    return %arg0, %c0_i32 : i32, i32
  }
  func.func @transform_1(%arg0: i32) -> (i32, i32) {
    %c0_i32 = arith.constant 0 : i32
    %c0_i32_0 = arith.constant 0 : i32
    %c0_i32_1 = arith.constant 0 : i32
    return %c0_i32, %c0_i32_0 : i32, i32
  }
  func.func @transform_2(%arg0: i32) -> (i32, i32) {
    %c0_i32 = arith.constant 0 : i32
    %c0_i32_0 = arith.constant 0 : i32
    %c0_i32_1 = arith.constant 0 : i32
    return %c0_i32, %c0_i32_0 : i32, i32
  }
  func.func @transform_3(%arg0: i32) -> (i32, i32) {
    %c0_i32 = arith.constant 0 : i32
    %c0_i32_0 = arith.constant 0 : i32
    %c0_i32_1 = arith.constant 0 : i32
    return %c0_i32, %c0_i32_0 : i32, i32
  }
  func.func @transform_4(%arg0: i32) -> (i32, i32) {
    %c0_i32 = arith.constant 0 : i32
    %c0_i32_0 = arith.constant 0 : i32
    %c0_i32_1 = arith.constant 0 : i32
    return %c0_i32, %c0_i32_0 : i32, i32
  }
  func.func @transform_5(%arg0: i32) -> (i32, i32) {
    %c0_i32 = arith.constant 0 : i32
    %c0_i32_0 = arith.constant 0 : i32
    %c0_i32_1 = arith.constant 0 : i32
    return %c0_i32, %c0_i32_0 : i32, i32
  }
  func.func @transform_6(%arg0: i32) -> (i32, i32) {
    %c0_i32 = arith.constant 0 : i32
    %c0_i32_0 = arith.constant 0 : i32
    %c0_i32_1 = arith.constant 0 : i32
    return %c0_i32, %c0_i32_0 : i32, i32
  }
  func.func @transform_7(%arg0: i32) -> (i32, i32) {
    %c0_i32 = arith.constant 0 : i32
    %c0_i32_0 = arith.constant 0 : i32
    return %arg0, %c0_i32 : i32, i32
  }
  func.func @transform_8(%arg0: i32) -> (i32, i32) {
    %c0_i32 = arith.constant 0 : i32
    %c0_i32_0 = arith.constant 0 : i32
    return %arg0, %c0_i32 : i32, i32
  }
}

</mosaic_0001>

<llo_original>
// kernel: error_model_forward.1
$region0: #{error_model_forward.1}
  #allocation0 [shape = 'u32[]', space=smem, size = 0x4, offset = 0x4, fixed_abs, tag = 'smem constant byte address 0x4 - core index']
  #allocation1 [shape = 'u32[144,128]{1,0:T(1,128)}', space=vmem, size = 0x12000, scoped, tag = 'internal scratch']
  %s0 = inlined_call_operand.vmem [shape: bf16[16,2048], index: 0, kind: input, shape index: {}]
  %s1 = inlined_call_operand.vmem [shape: bf16[2048,128], index: 1, kind: input, shape index: {}]
  %s2 = inlined_call_operand.vmem [shape: f32[1,128], index: 2, kind: input, shape index: {}]
  %s3 = inlined_call_operand.vmem [shape: bf16[128,128], index: 3, kind: input, shape index: {}]
  %s4 = inlined_call_operand.vmem [shape: f32[1,128], index: 4, kind: input, shape index: {}]
  %s5 = inlined_call_operand.vmem [shape: bf16[128,128], index: 5, kind: input, shape index: {}]
  %s6 = inlined_call_operand.vmem [shape: f32[1,128], index: 6, kind: input, shape index: {}]
  %s7 = inlined_call_operand.vmem [shape: s32[16,1], index: 7, kind: input, shape index: {}]
  %s8 = inlined_call_operand.vmem [shape: f32[16,1], index: 8, kind: output, shape index: {}]
  %s9 = sld [smem:[#allocation0]]
  $region42: #{error_model_forward.1} parent=0
    _
  %s11 = ssub.s32 1, %s9
  %s12 = scalar_select 0, %s11, %s9
  // Predicated region
  $region2: #{error_model_forward.1} parent=0 // pred_check
    _
  $region3: #{error_model_forward.1} parent=0 // pred_check_branch
    %14 = sbr.rel (0) target = $region5
  $region4: #{error_model_forward.1} parent=0 // pred_region
    _
  $region5: #{error_model_forward.1} parent=0 // pred_fallthru
    _
  // Predicated region
  $region6: #{error_model_forward.1} parent=0 // pred_check
    _
  $region7: #{error_model_forward.1} parent=0 // pred_check_branch
    %16 = sbr.rel (0) target = $region9
  $region8: #{error_model_forward.1} parent=0 // pred_region
    _
  $region9: #{error_model_forward.1} parent=0 // pred_fallthru
    _
  // Predicated region
  $region10: #{error_model_forward.1} parent=0 // pred_check
    _
  $region11: #{error_model_forward.1} parent=0 // pred_check_branch
    %18 = sbr.rel (0) target = $region13
  $region12: #{error_model_forward.1} parent=0 // pred_region
    _
  $region13: #{error_model_forward.1} parent=0 // pred_fallthru
    _
  // Predicated region
  $region14: #{error_model_forward.1} parent=0 // pred_check
    _
  $region15: #{error_model_forward.1} parent=0 // pred_check_branch
    %20 = sbr.rel (0) target = $region17
  $region16: #{error_model_forward.1} parent=0 // pred_region
    _
  $region17: #{error_model_forward.1} parent=0 // pred_fallthru
    _
  // Predicated region
  $region18: #{error_model_forward.1} parent=0 // pred_check
    _
  $region19: #{error_model_forward.1} parent=0 // pred_check_branch
    %22 = sbr.rel (0) target = $region21
  $region20: #{error_model_forward.1} parent=0 // pred_region
    _
  $region21: #{error_model_forward.1} parent=0 // pred_fallthru
    _
  // Predicated region
  $region22: #{error_model_forward.1} parent=0 // pred_check
    _
  $region23: #{error_model_forward.1} parent=0 // pred_check_branch
    %24 = sbr.rel (0) target = $region25
  $region24: #{error_model_forward.1} parent=0 // pred_region
    _
  $region25: #{error_model_forward.1} parent=0 // pred_fallthru
    _
  // Predicated region
  $region26: #{error_model_forward.1} parent=0 // pred_check
    _
  $region27: #{error_model_forward.1} parent=0 // pred_check_branch
    %26 = sbr.rel (0) target = $region29
  $region28: #{error_model_forward.1} parent=0 // pred_region
    _
  $region29: #{error_model_forward.1} parent=0 // pred_fallthru
    _
  // Predicated region
  $region30: #{error_model_forward.1} parent=0 // pred_check
    _
  $region31: #{error_model_forward.1} parent=0 // pred_check_branch
    %28 = sbr.rel (0) target = $region33
  $region32: #{error_model_forward.1} parent=0 // pred_region
    _
  $region33: #{error_model_forward.1} parent=0 // pred_fallthru
    _
  %v30 = vld [vmem:[%s0] sm:$0xff]
  %v31 = vld [vmem:[%s0 + $0x8] sm:$0xff]
  %v32 = vld [vmem:[%s0 + $0x10] sm:$0xff]
  %v33 = vld [vmem:[%s0 + $0x18] sm:$0xff]
  %v34 = vld [vmem:[%s0 + $0x20] sm:$0xff]
  %v35 = vld [vmem:[%s0 + $0x28] sm:$0xff]
  %v36 = vld [vmem:[%s0 + $0x30] sm:$0xff]
  %v37 = vld [vmem:[%s0 + $0x38] sm:$0xff]
  %v38 = vld [vmem:[%s0 + $0x40] sm:$0xff]
  %v39 = vld [vmem:[%s0 + $0x48] sm:$0xff]
  %v40 = vld [vmem:[%s0 + $0x50] sm:$0xff]
  %v41 = vld [vmem:[%s0 + $0x58] sm:$0xff]
  %v42 = vld [vmem:[%s0 + $0x60] sm:$0xff]
  %v43 = vld [vmem:[%s0 + $0x68] sm:$0xff]
  %v44 = vld [vmem:[%s0 + $0x70] sm:$0xff]
  %v45 = vld [vmem:[%s0 + $0x78] sm:$0xff]
  %v46 = vld [vmem:[%s1] sm:$0xf]
  %v47 = vld [vmem:[%s1 + $0x4] sm:$0xf]
  %v48 = vld [vmem:[%s1 + $0x8] sm:$0xf]
  %v49 = vld [vmem:[%s1 + $0xc] sm:$0xf]
  %v50 = vld [vmem:[%s1 + $0x10] sm:$0xf]
  %v51 = vld [vmem:[%s1 + $0x14] sm:$0xf]
  %v52 = vld [vmem:[%s1 + $0x18] sm:$0xf]
  %v53 = vld [vmem:[%s1 + $0x1c] sm:$0xf]
  %v54 = vld [vmem:[%s1 + $0x20] sm:$0xf]
  %v55 = vld [vmem:[%s1 + $0x24] sm:$0xf]
  %v56 = vld [vmem:[%s1 + $0x28] sm:$0xf]
  %v57 = vld [vmem:[%s1 + $0x2c] sm:$0xf]
  %v58 = vld [vmem:[%s1 + $0x30] sm:$0xf]
  %v59 = vld [vmem:[%s1 + $0x34] sm:$0xf]
  %v60 = vld [vmem:[%s1 + $0x38] sm:$0xf]
  %v61 = vld [vmem:[%s1 + $0x3c] sm:$0xf]
  %v62 = vld [vmem:[%s1 + $0x40] sm:$0xf]
  %v63 = vld [vmem:[%s1 + $0x44] sm:$0xf]
  %v64 = vld [vmem:[%s1 + $0x48] sm:$0xf]
  %v65 = vld [vmem:[%s1 + $0x4c] sm:$0xf]
  %v66 = vld [vmem:[%s1 + $0x50] sm:$0xf]
  %v67 = vld [vmem:[%s1 + $0x54] sm:$0xf]
  %v68 = vld [vmem:[%s1 + $0x58] sm:$0xf]
  %v69 = vld [vmem:[%s1 + $0x5c] sm:$0xf]
  %v70 = vld [vmem:[%s1 + $0x60] sm:$0xf]
  %v71 = vld [vmem:[%s1 + $0x64] sm:$0xf]
  %v72 = vld [vmem:[%s1 + $0x68] sm:$0xf]
  %v73 = vld [vmem:[%s1 + $0x6c] sm:$0xf]
  %v74 = vld [vmem:[%s1 + $0x70] sm:$0xf]
  %v75 = vld [vmem:[%s1 + $0x74] sm:$0xf]
  %v76 = vld [vmem:[%s1 + $0x78] sm:$0xf]
  %v77 = vld [vmem:[%s1 + $0x7c] sm:$0xf]
  %v78 = vld [vmem:[%s1 + $0x80] sm:$0xf]
  %v79 = vld [vmem:[%s1 + $0x84] sm:$0xf]
  %v80 = vld [vmem:[%s1 + $0x88] sm:$0xf]
  %v81 = vld [vmem:[%s1 + $0x8c] sm:$0xf]
  %v82 = vld [vmem:[%s1 + $0x90] sm:$0xf]
  %v83 = vld [vmem:[%s1 + $0x94] sm:$0xf]
  %v84 = vld [vmem:[%s1 + $0x98] sm:$0xf]
  %v85 = vld [vmem:[%s1 + $0x9c] sm:$0xf]
  %v86 = vld [vmem:[%s1 + $0xa0] sm:$0xf]
  %v87 = vld [vmem:[%s1 + $0xa4] sm:$0xf]
  %v88 = vld [vmem:[%s1 + $0xa8] sm:$0xf]
  %v89 = vld [vmem:[%s1 + $0xac] sm:$0xf]
  %v90 = vld [vmem:[%s1 + $0xb0] sm:$0xf]
  %v91 = vld [vmem:[%s1 + $0xb4] sm:$0xf]
  %v92 = vld [vmem:[%s1 + $0xb8] sm:$0xf]
  %v93 = vld [vmem:[%s1 + $0xbc] sm:$0xf]
  %v94 = vld [vmem:[%s1 + $0xc0] sm:$0xf]
  %v95 = vld [vmem:[%s1 + $0xc4] sm:$0xf]
  %v96 = vld [vmem:[%s1 + $0xc8] sm:$0xf]
  %v97 = vld [vmem:[%s1 + $0xcc] sm:$0xf]
  %v98 = vld [vmem:[%s1 + $0xd0] sm:$0xf]
  %v99 = vld [vmem:[%s1 + $0xd4] sm:$0xf]
  %v100 = vld [vmem:[%s1 + $0xd8] sm:$0xf]
  %v101 = vld [vmem:[%s1 + $0xdc] sm:$0xf]
  %v102 = vld [vmem:[%s1 + $0xe0] sm:$0xf]
  %v103 = vld [vmem:[%s1 + $0xe4] sm:$0xf]
  %v104 = vld [vmem:[%s1 + $0xe8] sm:$0xf]
  %v105 = vld [vmem:[%s1 + $0xec] sm:$0xf]
  %v106 = vld [vmem:[%s1 + $0xf0] sm:$0xf]
  %v107 = vld [vmem:[%s1 + $0xf4] sm:$0xf]
  %v108 = vld [vmem:[%s1 + $0xf8] sm:$0xf]
  %v109 = vld [vmem:[%s1 + $0xfc] sm:$0xf]
  %v110 = vld [vmem:[%s1 + $0x100] sm:$0xf]
  %v111 = vld [vmem:[%s1 + $0x104] sm:$0xf]
  %v112 = vld [vmem:[%s1 + $0x108] sm:$0xf]
  %v113 = vld [vmem:[%s1 + $0x10c] sm:$0xf]
  %v114 = vld [vmem:[%s1 + $0x110] sm:$0xf]
  %v115 = vld [vmem:[%s1 + $0x114] sm:$0xf]
  %v116 = vld [vmem:[%s1 + $0x118] sm:$0xf]
  %v117 = vld [vmem:[%s1 + $0x11c] sm:$0xf]
  %v118 = vld [vmem:[%s1 + $0x120] sm:$0xf]
  %v119 = vld [vmem:[%s1 + $0x124] sm:$0xf]
  %v120 = vld [vmem:[%s1 + $0x128] sm:$0xf]
  %v121 = vld [vmem:[%s1 + $0x12c] sm:$0xf]
  %v122 = vld [vmem:[%s1 + $0x130] sm:$0xf]
  %v123 = vld [vmem:[%s1 + $0x134] sm:$0xf]
  %v124 = vld [vmem:[%s1 + $0x138] sm:$0xf]
  %v125 = vld [vmem:[%s1 + $0x13c] sm:$0xf]
  %v126 = vld [vmem:[%s1 + $0x140] sm:$0xf]
  %v127 = vld [vmem:[%s1 + $0x144] sm:$0xf]
  %v128 = vld [vmem:[%s1 + $0x148] sm:$0xf]
  %v129 = vld [vmem:[%s1 + $0x14c] sm:$0xf]
  %v130 = vld [vmem:[%s1 + $0x150] sm:$0xf]
  %v131 = vld [vmem:[%s1 + $0x154] sm:$0xf]
  %v132 = vld [vmem:[%s1 + $0x158] sm:$0xf]
  %v133 = vld [vmem:[%s1 + $0x15c] sm:$0xf]
  %v134 = vld [vmem:[%s1 + $0x160] sm:$0xf]
  %v135 = vld [vmem:[%s1 + $0x164] sm:$0xf]
  %v136 = vld [vmem:[%s1 + $0x168] sm:$0xf]
  %v137 = vld [vmem:[%s1 + $0x16c] sm:$0xf]
  %v138 = vld [vmem:[%s1 + $0x170] sm:$0xf]
  %v139 = vld [vmem:[%s1 + $0x174] sm:$0xf]
  %v140 = vld [vmem:[%s1 + $0x178] sm:$0xf]
  %v141 = vld [vmem:[%s1 + $0x17c] sm:$0xf]
  %v142 = vld [vmem:[%s1 + $0x180] sm:$0xf]
  %v143 = vld [vmem:[%s1 + $0x184] sm:$0xf]
  %v144 = vld [vmem:[%s1 + $0x188] sm:$0xf]
  %v145 = vld [vmem:[%s1 + $0x18c] sm:$0xf]
  %v146 = vld [vmem:[%s1 + $0x190] sm:$0xf]
  %v147 = vld [vmem:[%s1 + $0x194] sm:$0xf]
  %v148 = vld [vmem:[%s1 + $0x198] sm:$0xf]
  %v149 = vld [vmem:[%s1 + $0x19c] sm:$0xf]
  %v150 = vld [vmem:[%s1 + $0x1a0] sm:$0xf]
  %v151 = vld [vmem:[%s1 + $0x1a4] sm:$0xf]
  %v152 = vld [vmem:[%s1 + $0x1a8] sm:$0xf]
  %v153 = vld [vmem:[%s1 + $0x1ac] sm:$0xf]
  %v154 = vld [vmem:[%s1 + $0x1b0] sm:$0xf]
  %v155 = vld [vmem:[%s1 + $0x1b4] sm:$0xf]
  %v156 = vld [vmem:[%s1 + $0x1b8] sm:$0xf]
  %v157 = vld [vmem:[%s1 + $0x1bc] sm:$0xf]
  %v158 = vld [vmem:[%s1 + $0x1c0] sm:$0xf]
  %v159 = vld [vmem:[%s1 + $0x1c4] sm:$0xf]
  %v160 = vld [vmem:[%s1 + $0x1c8] sm:$0xf]
  %v161 = vld [vmem:[%s1 + $0x1cc] sm:$0xf]
  %v162 = vld [vmem:[%s1 + $0x1d0] sm:$0xf]
  %v163 = vld [vmem:[%s1 + $0x1d4] sm:$0xf]
  %v164 = vld [vmem:[%s1 + $0x1d8] sm:$0xf]
  %v165 = vld [vmem:[%s1 + $0x1dc] sm:$0xf]
  %v166 = vld [vmem:[%s1 + $0x1e0] sm:$0xf]
  %v167 = vld [vmem:[%s1 + $0x1e4] sm:$0xf]
  %v168 = vld [vmem:[%s1 + $0x1e8] sm:$0xf]
  %v169 = vld [vmem:[%s1 + $0x1ec] sm:$0xf]
  %v170 = vld [vmem:[%s1 + $0x1f0] sm:$0xf]
  %v171 = vld [vmem:[%s1 + $0x1f4] sm:$0xf]
  %v172 = vld [vmem:[%s1 + $0x1f8] sm:$0xf]
  %v173 = vld [vmem:[%s1 + $0x1fc] sm:$0xf]
  %v174 = vld [vmem:[%s1 + $0x200] sm:$0xf]
  %v175 = vld [vmem:[%s1 + $0x204] sm:$0xf]
  %v176 = vld [vmem:[%s1 + $0x208] sm:$0xf]
  %v177 = vld [vmem:[%s1 + $0x20c] sm:$0xf]
  %v178 = vld [vmem:[%s1 + $0x210] sm:$0xf]
  %v179 = vld [vmem:[%s1 + $0x214] sm:$0xf]
  %v180 = vld [vmem:[%s1 + $0x218] sm:$0xf]
  %v181 = vld [vmem:[%s1 + $0x21c] sm:$0xf]
  %v182 = vld [vmem:[%s1 + $0x220] sm:$0xf]
  %v183 = vld [vmem:[%s1 + $0x224] sm:$0xf]
  %v184 = vld [vmem:[%s1 + $0x228] sm:$0xf]
  %v185 = vld [vmem:[%s1 + $0x22c] sm:$0xf]
  %v186 = vld [vmem:[%s1 + $0x230] sm:$0xf]
  %v187 = vld [vmem:[%s1 + $0x234] sm:$0xf]
  %v188 = vld [vmem:[%s1 + $0x238] sm:$0xf]
  %v189 = vld [vmem:[%s1 + $0x23c] sm:$0xf]
  %v190 = vld [vmem:[%s1 + $0x240] sm:$0xf]
  %v191 = vld [vmem:[%s1 + $0x244] sm:$0xf]
  %v192 = vld [vmem:[%s1 + $0x248] sm:$0xf]
  %v193 = vld [vmem:[%s1 + $0x24c] sm:$0xf]
  %v194 = vld [vmem:[%s1 + $0x250] sm:$0xf]
  %v195 = vld [vmem:[%s1 + $0x254] sm:$0xf]
  %v196 = vld [vmem:[%s1 + $0x258] sm:$0xf]
  %v197 = vld [vmem:[%s1 + $0x25c] sm:$0xf]
  %v198 = vld [vmem:[%s1 + $0x260] sm:$0xf]
  %v199 = vld [vmem:[%s1 + $0x264] sm:$0xf]
  %v200 = vld [vmem:[%s1 + $0x268] sm:$0xf]
  %v201 = vld [vmem:[%s1 + $0x26c] sm:$0xf]
  %v202 = vld [vmem:[%s1 + $0x270] sm:$0xf]
  %v203 = vld [vmem:[%s1 + $0x274] sm:$0xf]
  %v204 = vld [vmem:[%s1 + $0x278] sm:$0xf]
  %v205 = vld [vmem:[%s1 + $0x27c] sm:$0xf]
  %v206 = vld [vmem:[%s1 + $0x280] sm:$0xf]
  %v207 = vld [vmem:[%s1 + $0x284] sm:$0xf]
  %v208 = vld [vmem:[%s1 + $0x288] sm:$0xf]
  %v209 = vld [vmem:[%s1 + $0x28c] sm:$0xf]
  %v210 = vld [vmem:[%s1 + $0x290] sm:$0xf]
  %v211 = vld [vmem:[%s1 + $0x294] sm:$0xf]
  %v212 = vld [vmem:[%s1 + $0x298] sm:$0xf]
  %v213 = vld [vmem:[%s1 + $0x29c] sm:$0xf]
  %v214 = vld [vmem:[%s1 + $0x2a0] sm:$0xf]
  %v215 = vld [vmem:[%s1 + $0x2a4] sm:$0xf]
  %v216 = vld [vmem:[%s1 + $0x2a8] sm:$0xf]
  %v217 = vld [vmem:[%s1 + $0x2ac] sm:$0xf]
  %v218 = vld [vmem:[%s1 + $0x2b0] sm:$0xf]
  %v219 = vld [vmem:[%s1 + $0x2b4] sm:$0xf]
  %v220 = vld [vmem:[%s1 + $0x2b8] sm:$0xf]
  %v221 = vld [vmem:[%s1 + $0x2bc] sm:$0xf]
  %v222 = vld [vmem:[%s1 + $0x2c0] sm:$0xf]
  %v223 = vld [vmem:[%s1 + $0x2c4] sm:$0xf]
  %v224 = vld [vmem:[%s1 + $0x2c8] sm:$0xf]
  %v225 = vld [vmem:[%s1 + $0x2cc] sm:$0xf]
  %v226 = vld [vmem:[%s1 + $0x2d0] sm:$0xf]
  %v227 = vld [vmem:[%s1 + $0x2d4] sm:$0xf]
  %v228 = vld [vmem:[%s1 + $0x2d8] sm:$0xf]
  %v229 = vld [vmem:[%s1 + $0x2dc] sm:$0xf]
  %v230 = vld [vmem:[%s1 + $0x2e0] sm:$0xf]
  %v231 = vld [vmem:[%s1 + $0x2e4] sm:$0xf]
  %v232 = vld [vmem:[%s1 + $0x2e8] sm:$0xf]
  %v233 = vld [vmem:[%s1 + $0x2ec] sm:$0xf]
  %v234 = vld [vmem:[%s1 + $0x2f0] sm:$0xf]
  %v235 = vld [vmem:[%s1 + $0x2f4] sm:$0xf]
  %v236 = vld [vmem:[%s1 + $0x2f8] sm:$0xf]
  %v237 = vld [vmem:[%s1 + $0x2fc] sm:$0xf]
  %v238 = vld [vmem:[%s1 + $0x300] sm:$0xf]
  %v239 = vld [vmem:[%s1 + $0x304] sm:$0xf]
  %v240 = vld [vmem:[%s1 + $0x308] sm:$0xf]
  %v241 = vld [vmem:[%s1 + $0x30c] sm:$0xf]
  %v242 = vld [vmem:[%s1 + $0x310] sm:$0xf]
  %v243 = vld [vmem:[%s1 + $0x314] sm:$0xf]
  %v244 = vld [vmem:[%s1 + $0x318] sm:$0xf]
  %v245 = vld [vmem:[%s1 + $0x31c] sm:$0xf]
  %v246 = vld [vmem:[%s1 + $0x320] sm:$0xf]
  %v247 = vld [vmem:[%s1 + $0x324] sm:$0xf]
  %v248 = vld [vmem:[%s1 + $0x328] sm:$0xf]
  %v249 = vld [vmem:[%s1 + $0x32c] sm:$0xf]
  %v250 = vld [vmem:[%s1 + $0x330] sm:$0xf]
  %v251 = vld [vmem:[%s1 + $0x334] sm:$0xf]
  %v252 = vld [vmem:[%s1 + $0x338] sm:$0xf]
  %v253 = vld [vmem:[%s1 + $0x33c] sm:$0xf]
  %v254 = vld [vmem:[%s1 + $0x340] sm:$0xf]
  %v255 = vld [vmem:[%s1 + $0x344] sm:$0xf]
  %v256 = vld [vmem:[%s1 + $0x348] sm:$0xf]
  %v257 = vld [vmem:[%s1 + $0x34c] sm:$0xf]
  %v258 = vld [vmem:[%s1 + $0x350] sm:$0xf]
  %v259 = vld [vmem:[%s1 + $0x354] sm:$0xf]
  %v260 = vld [vmem:[%s1 + $0x358] sm:$0xf]
  %v261 = vld [vmem:[%s1 + $0x35c] sm:$0xf]
  %v262 = vld [vmem:[%s1 + $0x360] sm:$0xf]
  %v263 = vld [vmem:[%s1 + $0x364] sm:$0xf]
  %v264 = vld [vmem:[%s1 + $0x368] sm:$0xf]
  %v265 = vld [vmem:[%s1 + $0x36c] sm:$0xf]
  %v266 = vld [vmem:[%s1 + $0x370] sm:$0xf]
  %v267 = vld [vmem:[%s1 + $0x374] sm:$0xf]
  %v268 = vld [vmem:[%s1 + $0x378] sm:$0xf]
  %v269 = vld [vmem:[%s1 + $0x37c] sm:$0xf]
  %v270 = vld [vmem:[%s1 + $0x380] sm:$0xf]
  %v271 = vld [vmem:[%s1 + $0x384] sm:$0xf]
  %v272 = vld [vmem:[%s1 + $0x388] sm:$0xf]
  %v273 = vld [vmem:[%s1 + $0x38c] sm:$0xf]
  %v274 = vld [vmem:[%s1 + $0x390] sm:$0xf]
  %v275 = vld [vmem:[%s1 + $0x394] sm:$0xf]
  %v276 = vld [vmem:[%s1 + $0x398] sm:$0xf]
  %v277 = vld [vmem:[%s1 + $0x39c] sm:$0xf]
  %v278 = vld [vmem:[%s1 + $0x3a0] sm:$0xf]
  %v279 = vld [vmem:[%s1 + $0x3a4] sm:$0xf]
  %v280 = vld [vmem:[%s1 + $0x3a8] sm:$0xf]
  %v281 = vld [vmem:[%s1 + $0x3ac] sm:$0xf]
  %v282 = vld [vmem:[%s1 + $0x3b0] sm:$0xf]
  %v283 = vld [vmem:[%s1 + $0x3b4] sm:$0xf]
  %v284 = vld [vmem:[%s1 + $0x3b8] sm:$0xf]
  %v285 = vld [vmem:[%s1 + $0x3bc] sm:$0xf]
  %v286 = vld [vmem:[%s1 + $0x3c0] sm:$0xf]
  %v287 = vld [vmem:[%s1 + $0x3c4] sm:$0xf]
  %v288 = vld [vmem:[%s1 + $0x3c8] sm:$0xf]
  %v289 = vld [vmem:[%s1 + $0x3cc] sm:$0xf]
  %v290 = vld [vmem:[%s1 + $0x3d0] sm:$0xf]
  %v291 = vld [vmem:[%s1 + $0x3d4] sm:$0xf]
  %v292 = vld [vmem:[%s1 + $0x3d8] sm:$0xf]
  %v293 = vld [vmem:[%s1 + $0x3dc] sm:$0xf]
  %v294 = vld [vmem:[%s1 + $0x3e0] sm:$0xf]
  %v295 = vld [vmem:[%s1 + $0x3e4] sm:$0xf]
  %v296 = vld [vmem:[%s1 + $0x3e8] sm:$0xf]
  %v297 = vld [vmem:[%s1 + $0x3ec] sm:$0xf]
  %v298 = vld [vmem:[%s1 + $0x3f0] sm:$0xf]
  %v299 = vld [vmem:[%s1 + $0x3f4] sm:$0xf]
  %v300 = vld [vmem:[%s1 + $0x3f8] sm:$0xf]
  %v301 = vld [vmem:[%s1 + $0x3fc] sm:$0xf]
  %v302 = vld [vmem:[%s2] sm:$0x1]
  %v304 = vlaneseq
  %v305 = vshrl.u32 %v304, 7
  %v306 = vsub.s32 0, %v305
  %v307 = vrot.slane %v302, %v306
  %v325 = vunpack.c.l.b16 %v30
  %v326 = vunpack.c.h.b16 %v30
  %v327 = vunpack.c.l.b16 %v31
  %v328 = vunpack.c.h.b16 %v31
  %v329 = vunpack.c.l.b16 %v32
  %v330 = vunpack.c.h.b16 %v32
  %v331 = vunpack.c.l.b16 %v33
  %v332 = vunpack.c.h.b16 %v33
  %v333 = vunpack.c.l.b16 %v34
  %v334 = vunpack.c.h.b16 %v34
  %v335 = vunpack.c.l.b16 %v35
  %v336 = vunpack.c.h.b16 %v35
  %v337 = vunpack.c.l.b16 %v36
  %v338 = vunpack.c.h.b16 %v36
  %v339 = vunpack.c.l.b16 %v37
  %v340 = vunpack.c.h.b16 %v37
  %v341 = vunpack.c.l.b16 %v38
  %v342 = vunpack.c.h.b16 %v38
  %v343 = vunpack.c.l.b16 %v39
  %v344 = vunpack.c.h.b16 %v39
  %v345 = vunpack.c.l.b16 %v40
  %v346 = vunpack.c.h.b16 %v40
  %v347 = vunpack.c.l.b16 %v41
  %v348 = vunpack.c.h.b16 %v41
  %v349 = vunpack.c.l.b16 %v42
  %v350 = vunpack.c.h.b16 %v42
  %v351 = vunpack.c.l.b16 %v43
  %v352 = vunpack.c.h.b16 %v43
  %v353 = vunpack.c.l.b16 %v44
  %v354 = vunpack.c.h.b16 %v44
  %v355 = vunpack.c.l.b16 %v45
  %v356 = vunpack.c.h.b16 %v45
  %v357 = vpack.c.b16 %v341, %v325
  %v358 = vpack.c.b16 %v342, %v326
  %v359 = vpack.c.b16 %v343, %v327
  %v360 = vpack.c.b16 %v344, %v328
  %v361 = vpack.c.b16 %v345, %v329
  %v362 = vpack.c.b16 %v346, %v330
  %v363 = vpack.c.b16 %v347, %v331
  %v364 = vpack.c.b16 %v348, %v332
  %v365 = vpack.c.b16 %v349, %v333
  %v366 = vpack.c.b16 %v350, %v334
  %v367 = vpack.c.b16 %v351, %v335
  %v368 = vpack.c.b16 %v352, %v336
  %v369 = vpack.c.b16 %v353, %v337
  %v370 = vpack.c.b16 %v354, %v338
  %v371 = vpack.c.b16 %v355, %v339
  %v372 = vpack.c.b16 %v356, %v340
  %v645 = vunpack.c.l.b16 %v46
  %v646 = vunpack.c.l.b16 %v47
  %v647 = vunpack.c.l.b16 %v48
  %v648 = vunpack.c.l.b16 %v49
  %v649 = vunpack.c.l.b16 %v50
  %v650 = vunpack.c.l.b16 %v51
  %v651 = vunpack.c.l.b16 %v52
  %v652 = vunpack.c.l.b16 %v53
  %v653 = vunpack.c.l.b16 %v54
  %v654 = vunpack.c.l.b16 %v55
  %v655 = vunpack.c.l.b16 %v56
  %v656 = vunpack.c.l.b16 %v57
  %v657 = vunpack.c.l.b16 %v58
  %v658 = vunpack.c.l.b16 %v59
  %v659 = vunpack.c.l.b16 %v60
  %v660 = vunpack.c.l.b16 %v61
  %v661 = vunpack.c.l.b16 %v62
  %v662 = vunpack.c.l.b16 %v63
  %v663 = vunpack.c.l.b16 %v64
  %v664 = vunpack.c.l.b16 %v65
  %v665 = vunpack.c.l.b16 %v66
  %v666 = vunpack.c.l.b16 %v67
  %v667 = vunpack.c.l.b16 %v68
  %v668 = vunpack.c.l.b16 %v69
  %v669 = vunpack.c.l.b16 %v70
  %v670 = vunpack.c.l.b16 %v71
  %v671 = vunpack.c.l.b16 %v72
  %v672 = vunpack.c.l.b16 %v73
  %v673 = vunpack.c.l.b16 %v74
  %v674 = vunpack.c.l.b16 %v75
  %v675 = vunpack.c.l.b16 %v76
  %v676 = vunpack.c.l.b16 %v77
  %v677 = vunpack.c.l.b16 %v78
  %v678 = vunpack.c.l.b16 %v79
  %v679 = vunpack.c.l.b16 %v80
  %v680 = vunpack.c.l.b16 %v81
  %v681 = vunpack.c.l.b16 %v82
  %v682 = vunpack.c.l.b16 %v83
  %v683 = vunpack.c.l.b16 %v84
  %v684 = vunpack.c.l.b16 %v85
  %v685 = vunpack.c.l.b16 %v86
  %v686 = vunpack.c.l.b16 %v87
  %v687 = vunpack.c.l.b16 %v88
  %v688 = vunpack.c.l.b16 %v89
  %v689 = vunpack.c.l.b16 %v90
  %v690 = vunpack.c.l.b16 %v91
  %v691 = vunpack.c.l.b16 %v92
  %v692 = vunpack.c.l.b16 %v93
  %v693 = vunpack.c.l.b16 %v94
  %v694 = vunpack.c.l.b16 %v95
  %v695 = vunpack.c.l.b16 %v96
  %v696 = vunpack.c.l.b16 %v97
  %v697 = vunpack.c.l.b16 %v98
  %v698 = vunpack.c.l.b16 %v99
  %v699 = vunpack.c.l.b16 %v100
  %v700 = vunpack.c.l.b16 %v101
  %v701 = vunpack.c.l.b16 %v102
  %v702 = vunpack.c.l.b16 %v103
  %v703 = vunpack.c.l.b16 %v104
  %v704 = vunpack.c.l.b16 %v105
  %v705 = vunpack.c.l.b16 %v106
  %v706 = vunpack.c.l.b16 %v107
  %v707 = vunpack.c.l.b16 %v108
  %v708 = vunpack.c.l.b16 %v109
  %v709 = vunpack.c.l.b16 %v110
  %v710 = vunpack.c.l.b16 %v111
  %v711 = vunpack.c.l.b16 %v112
  %v712 = vunpack.c.l.b16 %v113
  %v713 = vunpack.c.l.b16 %v114
  %v714 = vunpack.c.l.b16 %v115
  %v715 = vunpack.c.l.b16 %v116
  %v716 = vunpack.c.l.b16 %v117
  %v717 = vunpack.c.l.b16 %v118
  %v718 = vunpack.c.l.b16 %v119
  %v719 = vunpack.c.l.b16 %v120
  %v720 = vunpack.c.l.b16 %v121
  %v721 = vunpack.c.l.b16 %v122
  %v722 = vunpack.c.l.b16 %v123
  %v723 = vunpack.c.l.b16 %v124
  %v724 = vunpack.c.l.b16 %v125
  %v725 = vunpack.c.l.b16 %v126
  %v726 = vunpack.c.l.b16 %v127
  %v727 = vunpack.c.l.b16 %v128
  %v728 = vunpack.c.l.b16 %v129
  %v729 = vunpack.c.l.b16 %v130
  %v730 = vunpack.c.l.b16 %v131
  %v731 = vunpack.c.l.b16 %v132
  %v732 = vunpack.c.l.b16 %v133
  %v733 = vunpack.c.l.b16 %v134
  %v734 = vunpack.c.l.b16 %v135
  %v735 = vunpack.c.l.b16 %v136
  %v736 = vunpack.c.l.b16 %v137
  %v737 = vunpack.c.l.b16 %v138
  %v738 = vunpack.c.l.b16 %v139
  %v739 = vunpack.c.l.b16 %v140
  %v740 = vunpack.c.l.b16 %v141
  %v741 = vunpack.c.l.b16 %v142
  %v742 = vunpack.c.l.b16 %v143
  %v743 = vunpack.c.l.b16 %v144
  %v744 = vunpack.c.l.b16 %v145
  %v745 = vunpack.c.l.b16 %v146
  %v746 = vunpack.c.l.b16 %v147
  %v747 = vunpack.c.l.b16 %v148
  %v748 = vunpack.c.l.b16 %v149
  %v749 = vunpack.c.l.b16 %v150
  %v750 = vunpack.c.l.b16 %v151
  %v751 = vunpack.c.l.b16 %v152
  %v752 = vunpack.c.l.b16 %v153
  %v753 = vunpack.c.l.b16 %v154
  %v754 = vunpack.c.l.b16 %v155
  %v755 = vunpack.c.l.b16 %v156
  %v756 = vunpack.c.l.b16 %v157
  %v757 = vunpack.c.l.b16 %v158
  %v758 = vunpack.c.l.b16 %v159
  %v759 = vunpack.c.l.b16 %v160
  %v760 = vunpack.c.l.b16 %v161
  %v761 = vunpack.c.l.b16 %v162
  %v762 = vunpack.c.l.b16 %v163
  %v763 = vunpack.c.l.b16 %v164
  %v764 = vunpack.c.l.b16 %v165
  %v765 = vunpack.c.l.b16 %v166
  %v766 = vunpack.c.l.b16 %v167
  %v767 = vunpack.c.l.b16 %v168
  %v768 = vunpack.c.l.b16 %v169
  %v769 = vunpack.c.l.b16 %v170
  %v770 = vunpack.c.l.b16 %v171
  %v771 = vunpack.c.l.b16 %v172
  %v772 = vunpack.c.l.b16 %v173
  %v773 = vunpack.c.l.b16 %v174
  %v774 = vunpack.c.l.b16 %v175
  %v775 = vunpack.c.l.b16 %v176
  %v776 = vunpack.c.l.b16 %v177
  %v777 = vunpack.c.l.b16 %v178
  %v778 = vunpack.c.l.b16 %v179
  %v779 = vunpack.c.l.b16 %v180
  %v780 = vunpack.c.l.b16 %v181
  %v781 = vunpack.c.l.b16 %v182
  %v782 = vunpack.c.l.b16 %v183
  %v783 = vunpack.c.l.b16 %v184
  %v784 = vunpack.c.l.b16 %v185
  %v785 = vunpack.c.l.b16 %v186
  %v786 = vunpack.c.l.b16 %v187
  %v787 = vunpack.c.l.b16 %v188
  %v788 = vunpack.c.l.b16 %v189
  %v789 = vunpack.c.l.b16 %v190
  %v790 = vunpack.c.l.b16 %v191
  %v791 = vunpack.c.l.b16 %v192
  %v792 = vunpack.c.l.b16 %v193
  %v793 = vunpack.c.l.b16 %v194
  %v794 = vunpack.c.l.b16 %v195
  %v795 = vunpack.c.l.b16 %v196
  %v796 = vunpack.c.l.b16 %v197
  %v797 = vunpack.c.l.b16 %v198
  %v798 = vunpack.c.l.b16 %v199
  %v799 = vunpack.c.l.b16 %v200
  %v800 = vunpack.c.l.b16 %v201
  %v801 = vunpack.c.l.b16 %v202
  %v802 = vunpack.c.l.b16 %v203
  %v803 = vunpack.c.l.b16 %v204
  %v804 = vunpack.c.l.b16 %v205
  %v805 = vunpack.c.l.b16 %v206
  %v806 = vunpack.c.l.b16 %v207
  %v807 = vunpack.c.l.b16 %v208
  %v808 = vunpack.c.l.b16 %v209
  %v809 = vunpack.c.l.b16 %v210
  %v810 = vunpack.c.l.b16 %v211
  %v811 = vunpack.c.l.b16 %v212
  %v812 = vunpack.c.l.b16 %v213
  %v813 = vunpack.c.l.b16 %v214
  %v814 = vunpack.c.l.b16 %v215
  %v815 = vunpack.c.l.b16 %v216
  %v816 = vunpack.c.l.b16 %v217
  %v817 = vunpack.c.l.b16 %v218
  %v818 = vunpack.c.l.b16 %v219
  %v819 = vunpack.c.l.b16 %v220
  %v820 = vunpack.c.l.b16 %v221
  %v821 = vunpack.c.l.b16 %v222
  %v822 = vunpack.c.l.b16 %v223
  %v823 = vunpack.c.l.b16 %v224
  %v824 = vunpack.c.l.b16 %v225
  %v825 = vunpack.c.l.b16 %v226
  %v826 = vunpack.c.l.b16 %v227
  %v827 = vunpack.c.l.b16 %v228
  %v828 = vunpack.c.l.b16 %v229
  %v829 = vunpack.c.l.b16 %v230
  %v830 = vunpack.c.l.b16 %v231
  %v831 = vunpack.c.l.b16 %v232
  %v832 = vunpack.c.l.b16 %v233
  %v833 = vunpack.c.l.b16 %v234
  %v834 = vunpack.c.l.b16 %v235
  %v835 = vunpack.c.l.b16 %v236
  %v836 = vunpack.c.l.b16 %v237
  %v837 = vunpack.c.l.b16 %v238
  %v838 = vunpack.c.l.b16 %v239
  %v839 = vunpack.c.l.b16 %v240
  %v840 = vunpack.c.l.b16 %v241
  %v841 = vunpack.c.l.b16 %v242
  %v842 = vunpack.c.l.b16 %v243
  %v843 = vunpack.c.l.b16 %v244
  %v844 = vunpack.c.l.b16 %v245
  %v845 = vunpack.c.l.b16 %v246
  %v846 = vunpack.c.l.b16 %v247
  %v847 = vunpack.c.l.b16 %v248
  %v848 = vunpack.c.l.b16 %v249
  %v849 = vunpack.c.l.b16 %v250
  %v850 = vunpack.c.l.b16 %v251
  %v851 = vunpack.c.l.b16 %v252
  %v852 = vunpack.c.l.b16 %v253
  %v853 = vunpack.c.l.b16 %v254
  %v854 = vunpack.c.l.b16 %v255
  %v855 = vunpack.c.l.b16 %v256
  %v856 = vunpack.c.l.b16 %v257
  %v857 = vunpack.c.l.b16 %v258
  %v858 = vunpack.c.l.b16 %v259
  %v859 = vunpack.c.l.b16 %v260
  %v860 = vunpack.c.l.b16 %v261
  %v861 = vunpack.c.l.b16 %v262
  %v862 = vunpack.c.l.b16 %v263
  %v863 = vunpack.c.l.b16 %v264
  %v864 = vunpack.c.l.b16 %v265
  %v865 = vunpack.c.l.b16 %v266
  %v866 = vunpack.c.l.b16 %v267
  %v867 = vunpack.c.l.b16 %v268
  %v868 = vunpack.c.l.b16 %v269
  %v869 = vunpack.c.l.b16 %v270
  %v870 = vunpack.c.l.b16 %v271
  %v871 = vunpack.c.l.b16 %v272
  %v872 = vunpack.c.l.b16 %v273
  %v873 = vunpack.c.l.b16 %v274
  %v874 = vunpack.c.l.b16 %v275
  %v875 = vunpack.c.l.b16 %v276
  %v876 = vunpack.c.l.b16 %v277
  %v877 = vunpack.c.l.b16 %v278
  %v878 = vunpack.c.l.b16 %v279
  %v879 = vunpack.c.l.b16 %v280
  %v880 = vunpack.c.l.b16 %v281
  %v881 = vunpack.c.l.b16 %v282
  %v882 = vunpack.c.l.b16 %v283
  %v883 = vunpack.c.l.b16 %v284
  %v884 = vunpack.c.l.b16 %v285
  %v885 = vunpack.c.l.b16 %v286
  %v886 = vunpack.c.l.b16 %v287
  %v887 = vunpack.c.l.b16 %v288
  %v888 = vunpack.c.l.b16 %v289
  %v889 = vunpack.c.l.b16 %v290
  %v890 = vunpack.c.l.b16 %v291
  %v891 = vunpack.c.l.b16 %v292
  %v892 = vunpack.c.l.b16 %v293
  %v893 = vunpack.c.l.b16 %v294
  %v894 = vunpack.c.l.b16 %v295
  %v895 = vunpack.c.l.b16 %v296
  %v896 = vunpack.c.l.b16 %v297
  %v897 = vunpack.c.l.b16 %v298
  %v898 = vunpack.c.l.b16 %v299
  %v899 = vunpack.c.l.b16 %v300
  %v900 = vunpack.c.l.b16 %v301
  %v901 = vpack.c.b16 %v646, %v645
  %v902 = vpack.c.b16 %v648, %v647
  %v903 = vpack.c.b16 %v650, %v649
  %v904 = vpack.c.b16 %v652, %v651
  %v905 = vpack.c.b16 %v654, %v653
  %v906 = vpack.c.b16 %v656, %v655
  %v907 = vpack.c.b16 %v658, %v657
  %v908 = vpack.c.b16 %v660, %v659
  %v909 = vpack.c.b16 %v662, %v661
  %v910 = vpack.c.b16 %v664, %v663
  %v911 = vpack.c.b16 %v666, %v665
  %v912 = vpack.c.b16 %v668, %v667
  %v913 = vpack.c.b16 %v670, %v669
  %v914 = vpack.c.b16 %v672, %v671
  %v915 = vpack.c.b16 %v674, %v673
  %v916 = vpack.c.b16 %v676, %v675
  %v917 = vpack.c.b16 %v678, %v677
  %v918 = vpack.c.b16 %v680, %v679
  %v919 = vpack.c.b16 %v682, %v681
  %v920 = vpack.c.b16 %v684, %v683
  %v921 = vpack.c.b16 %v686, %v685
  %v922 = vpack.c.b16 %v688, %v687
  %v923 = vpack.c.b16 %v690, %v689
  %v924 = vpack.c.b16 %v692, %v691
  %v925 = vpack.c.b16 %v694, %v693
  %v926 = vpack.c.b16 %v696, %v695
  %v927 = vpack.c.b16 %v698, %v697
  %v928 = vpack.c.b16 %v700, %v699
  %v929 = vpack.c.b16 %v702, %v701
  %v930 = vpack.c.b16 %v704, %v703
  %v931 = vpack.c.b16 %v706, %v705
  %v932 = vpack.c.b16 %v708, %v707
  %v933 = vpack.c.b16 %v710, %v709
  %v934 = vpack.c.b16 %v712, %v711
  %v935 = vpack.c.b16 %v714, %v713
  %v936 = vpack.c.b16 %v716, %v715
  %v937 = vpack.c.b16 %v718, %v717
  %v938 = vpack.c.b16 %v720, %v719
  %v939 = vpack.c.b16 %v722, %v721
  %v940 = vpack.c.b16 %v724, %v723
  %v941 = vpack.c.b16 %v726, %v725
  %v942 = vpack.c.b16 %v728, %v727
  %v943 = vpack.c.b16 %v730, %v729
  %v944 = vpack.c.b16 %v732, %v731
  %v945 = vpack.c.b16 %v734, %v733
  %v946 = vpack.c.b16 %v736, %v735
  %v947 = vpack.c.b16 %v738, %v737
  %v948 = vpack.c.b16 %v740, %v739
  %v949 = vpack.c.b16 %v742, %v741
  %v950 = vpack.c.b16 %v744, %v743
  %v951 = vpack.c.b16 %v746, %v745
  %v952 = vpack.c.b16 %v748, %v747
  %v953 = vpack.c.b16 %v750, %v749
  %v954 = vpack.c.b16 %v752, %v751
  %v955 = vpack.c.b16 %v754, %v753
  %v956 = vpack.c.b16 %v756, %v755
  %v957 = vpack.c.b16 %v758, %v757
  %v958 = vpack.c.b16 %v760, %v759
  %v959 = vpack.c.b16 %v762, %v761
  %v960 = vpack.c.b16 %v764, %v763
  %v961 = vpack.c.b16 %v766, %v765
  %v962 = vpack.c.b16 %v768, %v767
  %v963 = vpack.c.b16 %v770, %v769
  %v964 = vpack.c.b16 %v772, %v771
  %v965 = vpack.c.b16 %v774, %v773
  %v966 = vpack.c.b16 %v776, %v775
  %v967 = vpack.c.b16 %v778, %v777
  %v968 = vpack.c.b16 %v780, %v779
  %v969 = vpack.c.b16 %v782, %v781
  %v970 = vpack.c.b16 %v784, %v783
  %v971 = vpack.c.b16 %v786, %v785
  %v972 = vpack.c.b16 %v788, %v787
  %v973 = vpack.c.b16 %v790, %v789
  %v974 = vpack.c.b16 %v792, %v791
  %v975 = vpack.c.b16 %v794, %v793
  %v976 = vpack.c.b16 %v796, %v795
  %v977 = vpack.c.b16 %v798, %v797
  %v978 = vpack.c.b16 %v800, %v799
  %v979 = vpack.c.b16 %v802, %v801
  %v980 = vpack.c.b16 %v804, %v803
  %v981 = vpack.c.b16 %v806, %v805
  %v982 = vpack.c.b16 %v808, %v807
  %v983 = vpack.c.b16 %v810, %v809
  %v984 = vpack.c.b16 %v812, %v811
  %v985 = vpack.c.b16 %v814, %v813
  %v986 = vpack.c.b16 %v816, %v815
  %v987 = vpack.c.b16 %v818, %v817
  %v988 = vpack.c.b16 %v820, %v819
  %v989 = vpack.c.b16 %v822, %v821
  %v990 = vpack.c.b16 %v824, %v823
  %v991 = vpack.c.b16 %v826, %v825
  %v992 = vpack.c.b16 %v828, %v827
  %v993 = vpack.c.b16 %v830, %v829
  %v994 = vpack.c.b16 %v832, %v831
  %v995 = vpack.c.b16 %v834, %v833
  %v996 = vpack.c.b16 %v836, %v835
  %v997 = vpack.c.b16 %v838, %v837
  %v998 = vpack.c.b16 %v840, %v839
  %v999 = vpack.c.b16 %v842, %v841
  %v1000 = vpack.c.b16 %v844, %v843
  %v1001 = vpack.c.b16 %v846, %v845
  %v1002 = vpack.c.b16 %v848, %v847
  %v1003 = vpack.c.b16 %v850, %v849
  %v1004 = vpack.c.b16 %v852, %v851
  %v1005 = vpack.c.b16 %v854, %v853
  %v1006 = vpack.c.b16 %v856, %v855
  %v1007 = vpack.c.b16 %v858, %v857
  %v1008 = vpack.c.b16 %v860, %v859
  %v1009 = vpack.c.b16 %v862, %v861
  %v1010 = vpack.c.b16 %v864, %v863
  %v1011 = vpack.c.b16 %v866, %v865
  %v1012 = vpack.c.b16 %v868, %v867
  %v1013 = vpack.c.b16 %v870, %v869
  %v1014 = vpack.c.b16 %v872, %v871
  %v1015 = vpack.c.b16 %v874, %v873
  %v1016 = vpack.c.b16 %v876, %v875
  %v1017 = vpack.c.b16 %v878, %v877
  %v1018 = vpack.c.b16 %v880, %v879
  %v1019 = vpack.c.b16 %v882, %v881
  %v1020 = vpack.c.b16 %v884, %v883
  %v1021 = vpack.c.b16 %v886, %v885
  %v1022 = vpack.c.b16 %v888, %v887
  %v1023 = vpack.c.b16 %v890, %v889
  %v1024 = vpack.c.b16 %v892, %v891
  %v1025 = vpack.c.b16 %v894, %v893
  %v1026 = vpack.c.b16 %v896, %v895
  %v1027 = vpack.c.b16 %v898, %v897
  %v1028 = vpack.c.b16 %v900, %v899
  %1157 = vmatprep.subr.bf16.mxu0 0
  %1158 = vmatpush1.bf16.msra.mxu0 %v908
  %1159 = vmatprep.subr.bf16.mxu0 0
  %1160 = vmatpush1.bf16.msra.mxu0 %v907
  %1161 = vmatprep.subr.bf16.mxu0 0
  %1162 = vmatpush1.bf16.msra.mxu0 %v906
  %1163 = vmatprep.subr.bf16.mxu0 0
  %1164 = vmatpush1.bf16.msra.mxu0 %v905
  %1165 = vmatprep.subr.bf16.mxu0 0
  %1166 = vmatpush1.bf16.msra.mxu0 %v904
  %1167 = vmatprep.subr.bf16.mxu0 0
  %1168 = vmatpush1.bf16.msra.mxu0 %v903
  %1169 = vmatprep.subr.bf16.mxu0 0
  %1170 = vmatpush1.bf16.msra.mxu0 %v902
  %1171 = vmatprep.subr.bf16.mxu0 0
  %1172 = vmatpush1.bf16.msra.mxu0 %v901
  %1173 = vmatprep.subr.bf16.mxu0 0
  %1174 = vmatpush2.bf16.msra.mxu0 %v916
  %1175 = vmatprep.subr.bf16.mxu0 0
  %1176 = vmatpush2.bf16.msra.mxu0 %v915
  %1177 = vmatprep.subr.bf16.mxu0 0
  %1178 = vmatpush2.bf16.msra.mxu0 %v914
  %1179 = vmatprep.subr.bf16.mxu0 0
  %1180 = vmatpush2.bf16.msra.mxu0 %v913
  %1181 = vmatprep.subr.bf16.mxu0 0
  %1182 = vmatpush2.bf16.msra.mxu0 %v912
  %1183 = vmatprep.subr.bf16.mxu0 0
  %1184 = vmatpush2.bf16.msra.mxu0 %v911
  %1185 = vmatprep.subr.bf16.mxu0 0
  %1186 = vmatpush2.bf16.msra.mxu0 %v910
  %1187 = vmatprep.subr.bf16.mxu0 0
  %1188 = vmatpush2.bf16.msra.mxu0 %v909
  %1189 = vmatprep.mubr.bf16.mxu0 %v358
  %1190 = vmatmul.mubr.bf16.gmra.mxu0 %v357
  %v1191 = vpop.f32.mrf.mxu0
  %v1192 = vadd.f32 %v307, %v1191
  %v1193 = vpop.f32.mrf.mxu0
  %v1194 = vpop.f32.mrf.mxu0
  %v1195 = vadd.f32 %v307, %v1194
  %v1196 = vpop.f32.mrf.mxu0
  %1197 = vdwg.mxu0
  %1198 = vmatprep.subr.bf16.mxu0 0
  %1199 = vmatpush1.bf16.msra.mxu0 %v924
  %1200 = vmatprep.subr.bf16.mxu0 0
  %1201 = vmatpush1.bf16.msra.mxu0 %v923
  %1202 = vmatprep.subr.bf16.mxu0 0
  %1203 = vmatpush1.bf16.msra.mxu0 %v922
  %1204 = vmatprep.subr.bf16.mxu0 0
  %1205 = vmatpush1.bf16.msra.mxu0 %v921
  %1206 = vmatprep.subr.bf16.mxu0 0
  %1207 = vmatpush1.bf16.msra.mxu0 %v920
  %1208 = vmatprep.subr.bf16.mxu0 0
  %1209 = vmatpush1.bf16.msra.mxu0 %v919
  %1210 = vmatprep.subr.bf16.mxu0 0
  %1211 = vmatpush1.bf16.msra.mxu0 %v918
  %1212 = vmatprep.subr.bf16.mxu0 0
  %1213 = vmatpush1.bf16.msra.mxu0 %v917
  %1214 = vmatprep.subr.bf16.mxu0 0
  %1215 = vmatpush2.bf16.msra.mxu0 %v932
  %1216 = vmatprep.subr.bf16.mxu0 0
  %1217 = vmatpush2.bf16.msra.mxu0 %v931
  %1218 = vmatprep.subr.bf16.mxu0 0
  %1219 = vmatpush2.bf16.msra.mxu0 %v930
  %1220 = vmatprep.subr.bf16.mxu0 0
  %1221 = vmatpush2.bf16.msra.mxu0 %v929
  %1222 = vmatprep.subr.bf16.mxu0 0
  %1223 = vmatpush2.bf16.msra.mxu0 %v928
  %1224 = vmatprep.subr.bf16.mxu0 0
  %1225 = vmatpush2.bf16.msra.mxu0 %v927
  %1226 = vmatprep.subr.bf16.mxu0 0
  %1227 = vmatpush2.bf16.msra.mxu0 %v926
  %1228 = vmatprep.subr.bf16.mxu0 0
  %1229 = vmatpush2.bf16.msra.mxu0 %v925
  %1230 = vmatprep.mubr.bf16.mxu0 %v360
  %1231 = vmatmul.mubr.bf16.gmra.mxu0 %v359
  %v1232 = vpop.f32.mrf.mxu0
  %v1233 = vadd.f32 %v1192, %v1232
  %v1234 = vpop.f32.mrf.mxu0
  %v1235 = vpop.f32.mrf.mxu0
  %v1236 = vadd.f32 %v1195, %v1235
  %v1237 = vpop.f32.mrf.mxu0
  %1238 = vdwg.mxu0
  %1239 = vmatprep.subr.bf16.mxu0 0
  %1240 = vmatpush1.bf16.msra.mxu0 %v940
  %1241 = vmatprep.subr.bf16.mxu0 0
  %1242 = vmatpush1.bf16.msra.mxu0 %v939
  %1243 = vmatprep.subr.bf16.mxu0 0
  %1244 = vmatpush1.bf16.msra.mxu0 %v938
  %1245 = vmatprep.subr.bf16.mxu0 0
  %1246 = vmatpush1.bf16.msra.mxu0 %v937
  %1247 = vmatprep.subr.bf16.mxu0 0
  %1248 = vmatpush1.bf16.msra.mxu0 %v936
  %1249 = vmatprep.subr.bf16.mxu0 0
  %1250 = vmatpush1.bf16.msra.mxu0 %v935
  %1251 = vmatprep.subr.bf16.mxu0 0
  %1252 = vmatpush1.bf16.msra.mxu0 %v934
  %1253 = vmatprep.subr.bf16.mxu0 0
  %1254 = vmatpush1.bf16.msra.mxu0 %v933
  %1255 = vmatprep.subr.bf16.mxu0 0
  %1256 = vmatpush2.bf16.msra.mxu0 %v948
  %1257 = vmatprep.subr.bf16.mxu0 0
  %1258 = vmatpush2.bf16.msra.mxu0 %v947
  %1259 = vmatprep.subr.bf16.mxu0 0
  %1260 = vmatpush2.bf16.msra.mxu0 %v946
  %1261 = vmatprep.subr.bf16.mxu0 0
  %1262 = vmatpush2.bf16.msra.mxu0 %v945
  %1263 = vmatprep.subr.bf16.mxu0 0
  %1264 = vmatpush2.bf16.msra.mxu0 %v944
  %1265 = vmatprep.subr.bf16.mxu0 0
  %1266 = vmatpush2.bf16.msra.mxu0 %v943
  %1267 = vmatprep.subr.bf16.mxu0 0
  %1268 = vmatpush2.bf16.msra.mxu0 %v942
  %1269 = vmatprep.subr.bf16.mxu0 0
  %1270 = vmatpush2.bf16.msra.mxu0 %v941
  %1271 = vmatprep.mubr.bf16.mxu0 %v362
  %1272 = vmatmul.mubr.bf16.gmra.mxu0 %v361
  %v1273 = vpop.f32.mrf.mxu0
  %v1274 = vadd.f32 %v1233, %v1273
  %v1275 = vpop.f32.mrf.mxu0
  %v1276 = vpop.f32.mrf.mxu0
  %v1277 = vadd.f32 %v1236, %v1276
  %v1278 = vpop.f32.mrf.mxu0
  %1279 = vdwg.mxu0
  %1280 = vmatprep.subr.bf16.mxu0 0
  %1281 = vmatpush1.bf16.msra.mxu0 %v956
  %1282 = vmatprep.subr.bf16.mxu0 0
  %1283 = vmatpush1.bf16.msra.mxu0 %v955
  %1284 = vmatprep.subr.bf16.mxu0 0
  %1285 = vmatpush1.bf16.msra.mxu0 %v954
  %1286 = vmatprep.subr.bf16.mxu0 0
  %1287 = vmatpush1.bf16.msra.mxu0 %v953
  %1288 = vmatprep.subr.bf16.mxu0 0
  %1289 = vmatpush1.bf16.msra.mxu0 %v952
  %1290 = vmatprep.subr.bf16.mxu0 0
  %1291 = vmatpush1.bf16.msra.mxu0 %v951
  %1292 = vmatprep.subr.bf16.mxu0 0
  %1293 = vmatpush1.bf16.msra.mxu0 %v950
  %1294 = vmatprep.subr.bf16.mxu0 0
  %1295 = vmatpush1.bf16.msra.mxu0 %v949
  %1296 = vmatprep.subr.bf16.mxu0 0
  %1297 = vmatpush2.bf16.msra.mxu0 %v964
  %1298 = vmatprep.subr.bf16.mxu0 0
  %1299 = vmatpush2.bf16.msra.mxu0 %v963
  %1300 = vmatprep.subr.bf16.mxu0 0
  %1301 = vmatpush2.bf16.msra.mxu0 %v962
  %1302 = vmatprep.subr.bf16.mxu0 0
  %1303 = vmatpush2.bf16.msra.mxu0 %v961
  %1304 = vmatprep.subr.bf16.mxu0 0
  %1305 = vmatpush2.bf16.msra.mxu0 %v960
  %1306 = vmatprep.subr.bf16.mxu0 0
  %1307 = vmatpush2.bf16.msra.mxu0 %v959
  %1308 = vmatprep.subr.bf16.mxu0 0
  %1309 = vmatpush2.bf16.msra.mxu0 %v958
  %1310 = vmatprep.subr.bf16.mxu0 0
  %1311 = vmatpush2.bf16.msra.mxu0 %v957
  %1312 = vmatprep.mubr.bf16.mxu0 %v364
  %1313 = vmatmul.mubr.bf16.gmra.mxu0 %v363
  %v1314 = vpop.f32.mrf.mxu0
  %v1315 = vadd.f32 %v1274, %v1314
  %v1316 = vpop.f32.mrf.mxu0
  %v1317 = vpop.f32.mrf.mxu0
  %v1318 = vadd.f32 %v1277, %v1317
  %v1319 = vpop.f32.mrf.mxu0
  %1320 = vdwg.mxu0
  %1321 = vmatprep.subr.bf16.mxu0 0
  %1322 = vmatpush1.bf16.msra.mxu0 %v972
  %1323 = vmatprep.subr.bf16.mxu0 0
  %1324 = vmatpush1.bf16.msra.mxu0 %v971
  %1325 = vmatprep.subr.bf16.mxu0 0
  %1326 = vmatpush1.bf16.msra.mxu0 %v970
  %1327 = vmatprep.subr.bf16.mxu0 0
  %1328 = vmatpush1.bf16.msra.mxu0 %v969
  %1329 = vmatprep.subr.bf16.mxu0 0
  %1330 = vmatpush1.bf16.msra.mxu0 %v968
  %1331 = vmatprep.subr.bf16.mxu0 0
  %1332 = vmatpush1.bf16.msra.mxu0 %v967
  %1333 = vmatprep.subr.bf16.mxu0 0
  %1334 = vmatpush1.bf16.msra.mxu0 %v966
  %1335 = vmatprep.subr.bf16.mxu0 0
  %1336 = vmatpush1.bf16.msra.mxu0 %v965
  %1337 = vmatprep.subr.bf16.mxu0 0
  %1338 = vmatpush2.bf16.msra.mxu0 %v980
  %1339 = vmatprep.subr.bf16.mxu0 0
  %1340 = vmatpush2.bf16.msra.mxu0 %v979
  %1341 = vmatprep.subr.bf16.mxu0 0
  %1342 = vmatpush2.bf16.msra.mxu0 %v978
  %1343 = vmatprep.subr.bf16.mxu0 0
  %1344 = vmatpush2.bf16.msra.mxu0 %v977
  %1345 = vmatprep.subr.bf16.mxu0 0
  %1346 = vmatpush2.bf16.msra.mxu0 %v976
  %1347 = vmatprep.subr.bf16.mxu0 0
  %1348 = vmatpush2.bf16.msra.mxu0 %v975
  %1349 = vmatprep.subr.bf16.mxu0 0
  %1350 = vmatpush2.bf16.msra.mxu0 %v974
  %1351 = vmatprep.subr.bf16.mxu0 0
  %1352 = vmatpush2.bf16.msra.mxu0 %v973
  %1353 = vmatprep.mubr.bf16.mxu0 %v366
  %1354 = vmatmul.mubr.bf16.gmra.mxu0 %v365
  %v1355 = vpop.f32.mrf.mxu0
  %v1356 = vadd.f32 %v1315, %v1355
  %v1357 = vpop.f32.mrf.mxu0
  %v1358 = vpop.f32.mrf.mxu0
  %v1359 = vadd.f32 %v1318, %v1358
  %v1360 = vpop.f32.mrf.mxu0
  %1361 = vdwg.mxu0
  %1362 = vmatprep.subr.bf16.mxu0 0
  %1363 = vmatpush1.bf16.msra.mxu0 %v988
  %1364 = vmatprep.subr.bf16.mxu0 0
  %1365 = vmatpush1.bf16.msra.mxu0 %v987
  %1366 = vmatprep.subr.bf16.mxu0 0
  %1367 = vmatpush1.bf16.msra.mxu0 %v986
  %1368 = vmatprep.subr.bf16.mxu0 0
  %1369 = vmatpush1.bf16.msra.mxu0 %v985
  %1370 = vmatprep.subr.bf16.mxu0 0
  %1371 = vmatpush1.bf16.msra.mxu0 %v984
  %1372 = vmatprep.subr.bf16.mxu0 0
  %1373 = vmatpush1.bf16.msra.mxu0 %v983
  %1374 = vmatprep.subr.bf16.mxu0 0
  %1375 = vmatpush1.bf16.msra.mxu0 %v982
  %1376 = vmatprep.subr.bf16.mxu0 0
  %1377 = vmatpush1.bf16.msra.mxu0 %v981
  %1378 = vmatprep.subr.bf16.mxu0 0
  %1379 = vmatpush2.bf16.msra.mxu0 %v996
  %1380 = vmatprep.subr.bf16.mxu0 0
  %1381 = vmatpush2.bf16.msra.mxu0 %v995
  %1382 = vmatprep.subr.bf16.mxu0 0
  %1383 = vmatpush2.bf16.msra.mxu0 %v994
  %1384 = vmatprep.subr.bf16.mxu0 0
  %1385 = vmatpush2.bf16.msra.mxu0 %v993
  %1386 = vmatprep.subr.bf16.mxu0 0
  %1387 = vmatpush2.bf16.msra.mxu0 %v992
  %1388 = vmatprep.subr.bf16.mxu0 0
  %1389 = vmatpush2.bf16.msra.mxu0 %v991
  %1390 = vmatprep.subr.bf16.mxu0 0
  %1391 = vmatpush2.bf16.msra.mxu0 %v990
  %1392 = vmatprep.subr.bf16.mxu0 0
  %1393 = vmatpush2.bf16.msra.mxu0 %v989
  %1394 = vmatprep.mubr.bf16.mxu0 %v368
  %1395 = vmatmul.mubr.bf16.gmra.mxu0 %v367
  %v1396 = vpop.f32.mrf.mxu0
  %v1397 = vadd.f32 %v1356, %v1396
  %v1398 = vpop.f32.mrf.mxu0
  %v1399 = vpop.f32.mrf.mxu0
  %v1400 = vadd.f32 %v1359, %v1399
  %v1401 = vpop.f32.mrf.mxu0
  %1402 = vdwg.mxu0
  %1403 = vmatprep.subr.bf16.mxu0 0
  %1404 = vmatpush1.bf16.msra.mxu0 %v1004
  %1405 = vmatprep.subr.bf16.mxu0 0
  %1406 = vmatpush1.bf16.msra.mxu0 %v1003
  %1407 = vmatprep.subr.bf16.mxu0 0
  %1408 = vmatpush1.bf16.msra.mxu0 %v1002
  %1409 = vmatprep.subr.bf16.mxu0 0
  %1410 = vmatpush1.bf16.msra.mxu0 %v1001
  %1411 = vmatprep.subr.bf16.mxu0 0
  %1412 = vmatpush1.bf16.msra.mxu0 %v1000
  %1413 = vmatprep.subr.bf16.mxu0 0
  %1414 = vmatpush1.bf16.msra.mxu0 %v999
  %1415 = vmatprep.subr.bf16.mxu0 0
  %1416 = vmatpush1.bf16.msra.mxu0 %v998
  %1417 = vmatprep.subr.bf16.mxu0 0
  %1418 = vmatpush1.bf16.msra.mxu0 %v997
  %1419 = vmatprep.subr.bf16.mxu0 0
  %1420 = vmatpush2.bf16.msra.mxu0 %v1012
  %1421 = vmatprep.subr.bf16.mxu0 0
  %1422 = vmatpush2.bf16.msra.mxu0 %v1011
  %1423 = vmatprep.subr.bf16.mxu0 0
  %1424 = vmatpush2.bf16.msra.mxu0 %v1010
  %1425 = vmatprep.subr.bf16.mxu0 0
  %1426 = vmatpush2.bf16.msra.mxu0 %v1009
  %1427 = vmatprep.subr.bf16.mxu0 0
  %1428 = vmatpush2.bf16.msra.mxu0 %v1008
  %1429 = vmatprep.subr.bf16.mxu0 0
  %1430 = vmatpush2.bf16.msra.mxu0 %v1007
  %1431 = vmatprep.subr.bf16.mxu0 0
  %1432 = vmatpush2.bf16.msra.mxu0 %v1006
  %1433 = vmatprep.subr.bf16.mxu0 0
  %1434 = vmatpush2.bf16.msra.mxu0 %v1005
  %1435 = vmatprep.mubr.bf16.mxu0 %v370
  %1436 = vmatmul.mubr.bf16.gmra.mxu0 %v369
  %v1437 = vpop.f32.mrf.mxu0
  %v1438 = vadd.f32 %v1397, %v1437
  %v1439 = vpop.f32.mrf.mxu0
  %v1440 = vpop.f32.mrf.mxu0
  %v1441 = vadd.f32 %v1400, %v1440
  %v1442 = vpop.f32.mrf.mxu0
  %1443 = vdwg.mxu0
  %1444 = vmatprep.subr.bf16.mxu0 0
  %1445 = vmatpush1.bf16.msra.mxu0 %v1020
  %1446 = vmatprep.subr.bf16.mxu0 0
  %1447 = vmatpush1.bf16.msra.mxu0 %v1019
  %1448 = vmatprep.subr.bf16.mxu0 0
  %1449 = vmatpush1.bf16.msra.mxu0 %v1018
  %1450 = vmatprep.subr.bf16.mxu0 0
  %1451 = vmatpush1.bf16.msra.mxu0 %v1017
  %1452 = vmatprep.subr.bf16.mxu0 0
  %1453 = vmatpush1.bf16.msra.mxu0 %v1016
  %1454 = vmatprep.subr.bf16.mxu0 0
  %1455 = vmatpush1.bf16.msra.mxu0 %v1015
  %1456 = vmatprep.subr.bf16.mxu0 0
  %1457 = vmatpush1.bf16.msra.mxu0 %v1014
  %1458 = vmatprep.subr.bf16.mxu0 0
  %1459 = vmatpush1.bf16.msra.mxu0 %v1013
  %1460 = vmatprep.subr.bf16.mxu0 0
  %1461 = vmatpush2.bf16.msra.mxu0 %v1028
  %1462 = vmatprep.subr.bf16.mxu0 0
  %1463 = vmatpush2.bf16.msra.mxu0 %v1027
  %1464 = vmatprep.subr.bf16.mxu0 0
  %1465 = vmatpush2.bf16.msra.mxu0 %v1026
  %1466 = vmatprep.subr.bf16.mxu0 0
  %1467 = vmatpush2.bf16.msra.mxu0 %v1025
  %1468 = vmatprep.subr.bf16.mxu0 0
  %1469 = vmatpush2.bf16.msra.mxu0 %v1024
  %1470 = vmatprep.subr.bf16.mxu0 0
  %1471 = vmatpush2.bf16.msra.mxu0 %v1023
  %1472 = vmatprep.subr.bf16.mxu0 0
  %1473 = vmatpush2.bf16.msra.mxu0 %v1022
  %1474 = vmatprep.subr.bf16.mxu0 0
  %1475 = vmatpush2.bf16.msra.mxu0 %v1021
  %1476 = vmatprep.mubr.bf16.mxu0 %v372
  %1477 = vmatmul.mubr.bf16.gmra.mxu0 %v371
  %v1478 = vpop.f32.mrf.mxu0
  %v1479 = vadd.f32 %v1438, %v1478
  %v1480 = vpop.f32.mrf.mxu0
  %v1481 = vpop.f32.mrf.mxu0
  %v1482 = vadd.f32 %v1441, %v1481
  %v1483 = vpop.f32.mrf.mxu0
  %1484 = vdwg.mxu0
  %v1485 = vmax.f32 %v1479, 0.0
  %v1486 = vmax.f32 %v1482, 0.0
  %v1487 = vpack.c.bf16 %v1486, %v1485
  %v1488 = vld [vmem:[%s3] sm:$0xf]
  %v1489 = vld [vmem:[%s3 + $0x4] sm:$0xf]
  %v1490 = vld [vmem:[%s3 + $0x8] sm:$0xf]
  %v1491 = vld [vmem:[%s3 + $0xc] sm:$0xf]
  %v1492 = vld [vmem:[%s3 + $0x10] sm:$0xf]
  %v1493 = vld [vmem:[%s3 + $0x14] sm:$0xf]
  %v1494 = vld [vmem:[%s3 + $0x18] sm:$0xf]
  %v1495 = vld [vmem:[%s3 + $0x1c] sm:$0xf]
  %v1496 = vld [vmem:[%s3 + $0x20] sm:$0xf]
  %v1497 = vld [vmem:[%s3 + $0x24] sm:$0xf]
  %v1498 = vld [vmem:[%s3 + $0x28] sm:$0xf]
  %v1499 = vld [vmem:[%s3 + $0x2c] sm:$0xf]
  %v1500 = vld [vmem:[%s3 + $0x30] sm:$0xf]
  %v1501 = vld [vmem:[%s3 + $0x34] sm:$0xf]
  %v1502 = vld [vmem:[%s3 + $0x38] sm:$0xf]
  %v1503 = vld [vmem:[%s3 + $0x3c] sm:$0xf]
  %v1504 = vld [vmem:[%s4] sm:$0x1]
  %v1506 = vlaneseq
  %v1507 = vshrl.u32 %v1506, 7
  %v1508 = vsub.s32 0, %v1507
  %v1509 = vrot.slane %v1504, %v1508
  %v1527 = vunpack.c.l.b16 %v1488
  %v1528 = vunpack.c.l.b16 %v1489
  %v1529 = vunpack.c.l.b16 %v1490
  %v1530 = vunpack.c.l.b16 %v1491
  %v1531 = vunpack.c.l.b16 %v1492
  %v1532 = vunpack.c.l.b16 %v1493
  %v1533 = vunpack.c.l.b16 %v1494
  %v1534 = vunpack.c.l.b16 %v1495
  %v1535 = vunpack.c.l.b16 %v1496
  %v1536 = vunpack.c.l.b16 %v1497
  %v1537 = vunpack.c.l.b16 %v1498
  %v1538 = vunpack.c.l.b16 %v1499
  %v1539 = vunpack.c.l.b16 %v1500
  %v1540 = vunpack.c.l.b16 %v1501
  %v1541 = vunpack.c.l.b16 %v1502
  %v1542 = vunpack.c.l.b16 %v1503
  %v1543 = vpack.c.b16 %v1528, %v1527
  %v1544 = vpack.c.b16 %v1530, %v1529
  %v1545 = vpack.c.b16 %v1532, %v1531
  %v1546 = vpack.c.b16 %v1534, %v1533
  %v1547 = vpack.c.b16 %v1536, %v1535
  %v1548 = vpack.c.b16 %v1538, %v1537
  %v1549 = vpack.c.b16 %v1540, %v1539
  %v1550 = vpack.c.b16 %v1542, %v1541
  %1559 = vmatprep.subr.bf16.mxu0 0
  %1560 = vmatpush1.bf16.msra.mxu0 %v1550
  %1561 = vmatprep.subr.bf16.mxu0 0
  %1562 = vmatpush1.bf16.msra.mxu0 %v1549
  %1563 = vmatprep.subr.bf16.mxu0 0
  %1564 = vmatpush1.bf16.msra.mxu0 %v1548
  %1565 = vmatprep.subr.bf16.mxu0 0
  %1566 = vmatpush1.bf16.msra.mxu0 %v1547
  %1567 = vmatprep.subr.bf16.mxu0 0
  %1568 = vmatpush1.bf16.msra.mxu0 %v1546
  %1569 = vmatprep.subr.bf16.mxu0 0
  %1570 = vmatpush1.bf16.msra.mxu0 %v1545
  %1571 = vmatprep.subr.bf16.mxu0 0
  %1572 = vmatpush1.bf16.msra.mxu0 %v1544
  %1573 = vmatprep.subr.bf16.mxu0 0
  %1574 = vmatpush1.bf16.msra.mxu0 %v1543
  %1575 = vmatprep.subr.bf16.mxu0 0
  %1576 = vmatpush2.bf16.msra.mxu0 0
  %1577 = vmatprep.subr.bf16.mxu0 0
  %1578 = vmatpush2.bf16.msra.mxu0 0
  %1579 = vmatprep.subr.bf16.mxu0 0
  %1580 = vmatpush2.bf16.msra.mxu0 0
  %1581 = vmatprep.subr.bf16.mxu0 0
  %1582 = vmatpush2.bf16.msra.mxu0 0
  %1583 = vmatprep.subr.bf16.mxu0 0
  %1584 = vmatpush2.bf16.msra.mxu0 0
  %1585 = vmatprep.subr.bf16.mxu0 0
  %1586 = vmatpush2.bf16.msra.mxu0 0
  %1587 = vmatprep.subr.bf16.mxu0 0
  %1588 = vmatpush2.bf16.msra.mxu0 0
  %1589 = vmatprep.subr.bf16.mxu0 0
  %1590 = vmatpush2.bf16.msra.mxu0 0
  %1591 = vmatprep.mubr.bf16.mxu0 0
  %1592 = vmatmul.mubr.bf16.gmra.mxu0 %v1487
  %v1593 = vpop.f32.mrf.mxu0
  %v1594 = vadd.f32 %v1509, %v1593
  %v1595 = vpop.f32.mrf.mxu0
  %v1596 = vpop.f32.mrf.mxu0
  %v1597 = vadd.f32 %v1509, %v1596
  %v1598 = vpop.f32.mrf.mxu0
  %1599 = vdwg.mxu0
  %v1600 = vmax.f32 %v1594, 0.0
  %v1601 = vmax.f32 %v1597, 0.0
  %v1602 = vpack.c.bf16 %v1601, %v1600
  %v1603 = vld [vmem:[%s5] sm:$0xf]
  %v1604 = vld [vmem:[%s5 + $0x4] sm:$0xf]
  %v1605 = vld [vmem:[%s5 + $0x8] sm:$0xf]
  %v1606 = vld [vmem:[%s5 + $0xc] sm:$0xf]
  %v1607 = vld [vmem:[%s5 + $0x10] sm:$0xf]
  %v1608 = vld [vmem:[%s5 + $0x14] sm:$0xf]
  %v1609 = vld [vmem:[%s5 + $0x18] sm:$0xf]
  %v1610 = vld [vmem:[%s5 + $0x1c] sm:$0xf]
  %v1611 = vld [vmem:[%s5 + $0x20] sm:$0xf]
  %v1612 = vld [vmem:[%s5 + $0x24] sm:$0xf]
  %v1613 = vld [vmem:[%s5 + $0x28] sm:$0xf]
  %v1614 = vld [vmem:[%s5 + $0x2c] sm:$0xf]
  %v1615 = vld [vmem:[%s5 + $0x30] sm:$0xf]
  %v1616 = vld [vmem:[%s5 + $0x34] sm:$0xf]
  %v1617 = vld [vmem:[%s5 + $0x38] sm:$0xf]
  %v1618 = vld [vmem:[%s5 + $0x3c] sm:$0xf]
  %v1619 = vld [vmem:[%s6] sm:$0x1]
  %v1621 = vlaneseq
  %v1622 = vshrl.u32 %v1621, 7
  %v1623 = vsub.s32 0, %v1622
  %v1624 = vrot.slane %v1619, %v1623
  %v1642 = vunpack.c.l.b16 %v1603
  %v1643 = vunpack.c.l.b16 %v1604
  %v1644 = vunpack.c.l.b16 %v1605
  %v1645 = vunpack.c.l.b16 %v1606
  %v1646 = vunpack.c.l.b16 %v1607
  %v1647 = vunpack.c.l.b16 %v1608
  %v1648 = vunpack.c.l.b16 %v1609
  %v1649 = vunpack.c.l.b16 %v1610
  %v1650 = vunpack.c.l.b16 %v1611
  %v1651 = vunpack.c.l.b16 %v1612
  %v1652 = vunpack.c.l.b16 %v1613
  %v1653 = vunpack.c.l.b16 %v1614
  %v1654 = vunpack.c.l.b16 %v1615
  %v1655 = vunpack.c.l.b16 %v1616
  %v1656 = vunpack.c.l.b16 %v1617
  %v1657 = vunpack.c.l.b16 %v1618
  %v1658 = vpack.c.b16 %v1643, %v1642
  %v1659 = vpack.c.b16 %v1645, %v1644
  %v1660 = vpack.c.b16 %v1647, %v1646
  %v1661 = vpack.c.b16 %v1649, %v1648
  %v1662 = vpack.c.b16 %v1651, %v1650
  %v1663 = vpack.c.b16 %v1653, %v1652
  %v1664 = vpack.c.b16 %v1655, %v1654
  %v1665 = vpack.c.b16 %v1657, %v1656
  %1674 = vmatprep.subr.bf16.mxu0 0
  %1675 = vmatpush1.bf16.msra.mxu0 %v1665
  %1676 = vmatprep.subr.bf16.mxu0 0
  %1677 = vmatpush1.bf16.msra.mxu0 %v1664
  %1678 = vmatprep.subr.bf16.mxu0 0
  %1679 = vmatpush1.bf16.msra.mxu0 %v1663
  %1680 = vmatprep.subr.bf16.mxu0 0
  %1681 = vmatpush1.bf16.msra.mxu0 %v1662
  %1682 = vmatprep.subr.bf16.mxu0 0
  %1683 = vmatpush1.bf16.msra.mxu0 %v1661
  %1684 = vmatprep.subr.bf16.mxu0 0
  %1685 = vmatpush1.bf16.msra.mxu0 %v1660
  %1686 = vmatprep.subr.bf16.mxu0 0
  %1687 = vmatpush1.bf16.msra.mxu0 %v1659
  %1688 = vmatprep.subr.bf16.mxu0 0
  %1689 = vmatpush1.bf16.msra.mxu0 %v1658
  %1690 = vmatprep.subr.bf16.mxu0 0
  %1691 = vmatpush2.bf16.msra.mxu0 0
  %1692 = vmatprep.subr.bf16.mxu0 0
  %1693 = vmatpush2.bf16.msra.mxu0 0
  %1694 = vmatprep.subr.bf16.mxu0 0
  %1695 = vmatpush2.bf16.msra.mxu0 0
  %1696 = vmatprep.subr.bf16.mxu0 0
  %1697 = vmatpush2.bf16.msra.mxu0 0
  %1698 = vmatprep.subr.bf16.mxu0 0
  %1699 = vmatpush2.bf16.msra.mxu0 0
  %1700 = vmatprep.subr.bf16.mxu0 0
  %1701 = vmatpush2.bf16.msra.mxu0 0
  %1702 = vmatprep.subr.bf16.mxu0 0
  %1703 = vmatpush2.bf16.msra.mxu0 0
  %1704 = vmatprep.subr.bf16.mxu0 0
  %1705 = vmatpush2.bf16.msra.mxu0 0
  %1706 = vmatprep.mubr.bf16.mxu0 0
  %1707 = vmatmul.mubr.bf16.gmra.mxu0 %v1602
  %v1708 = vpop.f32.mrf.mxu0
  %v1709 = vadd.f32 %v1624, %v1708
  %v1710 = vpop.f32.mrf.mxu0
  %v1711 = vpop.f32.mrf.mxu0
  %v1712 = vadd.f32 %v1624, %v1711
  %v1713 = vpop.f32.mrf.mxu0
  %1714 = vdwg.mxu0
  %v1715 = vmax.f32 %v1709, 0.0
  %v1716 = vmax.f32 %v1712, 0.0
  %v1717 = vlaneseq
  %v1718 = vand.u32 %v1717, 127
  %v1719 = vld [vmem:[%s7] sm:$0xff]
  %v1720 = vld [vmem:[%s7 + $0x8] sm:$0xff]
  %1721 = vset.pattern.permute.xlu0 0
  %1722 = vperm.xlu0 %1721, %v1719
  %v1723 = vpop.permute.xlu0 %1722
  %1724 = vset.pattern.permute.xlu0 0
  %1725 = vperm.xlu0 %1724, %v1720
  %v1726 = vpop.permute.xlu0 %1725
  %vm1727 = vcmp.eq.s32.totalorder %v1718, %v1723
  %vm1728 = vcmp.eq.s32.totalorder %v1718, %v1726
  %v1729 = vsel %vm1727, %v1715, 0.0
  %v1730 = vsel %vm1728, %v1716, 0.0
  %1731 = vadd.xlane.f32.xlu0 %v1729
  %v1732 = vpop.xlane.xlu0 %1731
  %1733 = vadd.xlane.f32.xlu0 %v1730
  %v1734 = vpop.xlane.xlu0 %1733
  %vm1735 = vcmask 7168
  %1736 = vst.msk [vmem:[%s8] sm:$0xff] %vm1735, %v1732
  %1737 = vst.msk [vmem:[%s8 + $0x8] sm:$0xff] %vm1735, %v1734
  // Predicated region
  $region34: #{error_model_forward.1} parent=0 // pred_check
    _
  $region35: #{error_model_forward.1} parent=0 // pred_check_branch
    %1739 = sbr.rel (0) target = $region37
  $region36: #{error_model_forward.1} parent=0 // pred_region
    _
  $region37: #{error_model_forward.1} parent=0 // pred_fallthru
    _
  // Predicated region
  $region38: #{error_model_forward.1} parent=0 // pred_check
    _
  $region39: #{error_model_forward.1} parent=0 // pred_check_branch
    %1741 = sbr.rel (0) target = $region41
  $region40: #{error_model_forward.1} parent=0 // pred_region
    _
  $region41: #{error_model_forward.1} parent=0 // pred_fallthru
    _

</llo_original>
